<compile_context>
chip_gen: v6e
topology: v6e:2x2x1
jax: 0.10.0
libtpu: 0.0.40
codegen_flags: <defaults>
</compile_context>

<pallas_src>
import functools

import jax
import jax.numpy as jnp
from jax.experimental import pallas as pl
from jax.experimental.pallas import tpu as pltpu


def _round_up(x, m):
    return (x + m - 1) // m * m


# ----------------------------- Pallas kernel -------------------------------
def _value_net_kernel(lstm_hidden_dim, seq_len,
                      x_ref,                # (Bb, T*D)    bf16
                      self_ref,             # (Bb, S)      bf16
                      w_ihb_ref,            # (T*D, T*4H)  bf16, block-diagonal
                      w_hh_ref,             # (H, 4H)      bf16, gates (i,f,o,g)
                      b_g_ref,              # (1, 4H)      f32  (b_ih + b_hh)
                      w1s_ref, w1h_ref,     # (S, M1), (H, M1)   bf16
                      b1_ref,               # (1, M1)      f32
                      w2_ref, b2_ref,       # (M1, M2) bf16, (1, M2) f32
                      w3p_ref,              # (M2, 128)    bf16 (w3 in lane 0)
                      b3_ref,               # (1, 128)     f32
                      out_ref,              # (Bb, 128)    f32 (value in lane 0)
                      gates_scr):           # (Bb, T*4H)   f32 VMEM scratch
    H = lstm_hidden_dim
    T = seq_len
    G = 4 * H
    Bb = x_ref.shape[0]

    # Hoisted input projection for ALL timesteps: one MXU call with K = T*D.
    # Stage the result in VMEM scratch so per-step reads bound vreg liveness.
    gates_scr[...] = jnp.dot(x_ref[...], w_ihb_ref[...],
                             preferred_element_type=jnp.float32)

    b_g = b_g_ref[...]
    w_hh = w_hh_ref[...]
    h = jnp.zeros((Bb, H), jnp.float32)
    c = jnp.zeros((Bb, H), jnp.float32)

    # T (# humans) is small; static unroll keeps the serial chain visible to
    # the scheduler while the big gates tensor stays behind a ref.
    for t in range(T):
        gates = (gates_scr[:, t * G:(t + 1) * G] + b_g
                 + jnp.dot(h.astype(jnp.bfloat16), w_hh,
                           preferred_element_type=jnp.float32))
        sig = jax.nn.sigmoid(gates[:, :3 * H])      # i, f, o in one EUP pass
        g_g = jnp.tanh(gates[:, 3 * H:])
        i_g = sig[:, :H]
        f_g = sig[:, H:2 * H]
        o_g = sig[:, 2 * H:3 * H]
        c = f_g * c + i_g * g_g
        h = o_g * jnp.tanh(c)

    # MLP.  w1 split (self / hidden) so no concat at an unaligned lane offset.
    x = (jnp.dot(self_ref[...], w1s_ref[...], preferred_element_type=jnp.float32)
         + jnp.dot(h.astype(jnp.bfloat16), w1h_ref[...],
                   preferred_element_type=jnp.float32)
         + b1_ref[...])
    x = jnp.maximum(x, 0.0)
    x = jnp.dot(x.astype(jnp.bfloat16), w2_ref[...],
                preferred_element_type=jnp.float32) + b2_ref[...]
    x = jnp.maximum(x, 0.0)
    # Lane-dense final layer: (Bb, M2) @ (M2, 128); unmasked 128-lane store.
    out_ref[...] = (jnp.dot(x.astype(jnp.bfloat16), w3p_ref[...],
                            preferred_element_type=jnp.float32)
                    + b3_ref[...]).astype(out_ref.dtype)


# ------------------------------ JAX wrapper --------------------------------
def value_network1_forward(state, kparams, *, self_state_dim, lstm_hidden_dim,
                           block_b=256):
    """state: (B, T, D) float32.  Returns (B, 1) float32."""
    B, T, D = state.shape
    H = lstm_hidden_dim
    S = self_state_dim
    G = 4 * H
    assert kparams["w_ih_blk"].shape == (T * D, T * G), (
        "kparams were prepared for a different seq_len (# humans)")

    # ---- batch tiling: multiple of 8 sublanes; >=2 grid steps when possible
    #      (feeds both v7x TensorCores); VMEM is never the limiter here
    #      (< 2 MiB working set per tile even at Bb=512).
    Bp8 = _round_up(B, 8)
    Bb = min(_round_up(block_b, 8), Bp8)
    if -(-Bp8 // Bb) < 2 and Bp8 >= 16:
        Bb = _round_up(-(-Bp8 // 2), 8)
    Bp = _round_up(B, Bb)
    n_tiles = Bp // Bb

    # bf16 DMA for the only batch-sized inputs (matmul operands are bf16
    # anyway); minor-dim reshape (T, D) -> T*D is free (no transpose).
    state_bf = state.astype(jnp.bfloat16)
    self_state = state_bf[:, 0, :S]
    if Bp != B:
        state_bf = jnp.pad(state_bf, ((0, Bp - B), (0, 0), (0, 0)))
        self_state = jnp.pad(self_state, ((0, Bp - B), (0, 0)))
    state2d = state_bf.reshape(Bp, T * D)

    m1 = kparams["b1"].shape[-1]
    m2 = kparams["b2"].shape[-1]
    flops = 2 * Bp * (T * D * T * G          # block-diagonal input projection
                      + T * H * G            # recurrent h @ W_hh
                      + S * m1 + H * m1 + m1 * m2 + m2 * 128)
    transcendentals = Bp * T * 5 * H
    bytes_accessed = (int(state2d.size) + int(self_state.size)) * 2 \
        + Bp * 128 * 4 \
        + sum(int(v.size) * v.dtype.itemsize for v in kparams.values())

    kernel = functools.partial(_value_net_kernel, H, T)

    weights = (kparams["w_ih_blk"], kparams["w_hh_t"], kparams["b_gates"],
               kparams["w1_s_t"], kparams["w1_h_t"], kparams["b1"],
               kparams["w2_t"], kparams["b2"], kparams["w3_pad"],
               kparams["b3_row"])
    weight_specs = [pl.BlockSpec(w.shape, lambda i: (0, 0)) for w in weights]

    out = pl.pallas_call(
        kernel,
        out_shape=jax.ShapeDtypeStruct((Bp, 128), jnp.float32),
        grid=(n_tiles,),
        in_specs=[pl.BlockSpec((Bb, T * D), lambda i: (i, 0)),
                  pl.BlockSpec((Bb, S), lambda i: (i, 0))] + weight_specs,
        out_specs=pl.BlockSpec((Bb, 128), lambda i: (i, 0)),
        scratch_shapes=[pltpu.VMEM((Bb, T * G), jnp.float32)],
        compiler_params=pltpu.CompilerParams(
            dimension_semantics=("parallel",)),
        cost_estimate=pl.CostEstimate(flops=flops,
                                      transcendentals=transcendentals,
                                      bytes_accessed=bytes_accessed),
    )(state2d, self_state, *weights)
    # Lane-dense (Bp, 128) output: the value lives in lane 0.
    return out[:B, :1]


# ------------------------- deterministic parameters ------------------------
def init_params(key, input_dim, self_state_dim, mlp_dims, lstm_hidden_dim):
    """Raw parameters mirroring the PyTorch module layout / init."""
    H = lstm_hidden_dim
    ks = jax.random.split(key, 10)

    def unif(k, shape, fan_in):
        bound = 1.0 / jnp.sqrt(jnp.float32(fan_in))
        return jax.random.uniform(k, shape, jnp.float32, -bound, bound)

    in_dim = self_state_dim + H
    m1, m2, m3 = mlp_dims
    assert m3 == 1
    return dict(
        # torch.nn.LSTM, gate order (i, f, g, o)
        w_ih=unif(ks[0], (4 * H, input_dim), H),
        w_hh=unif(ks[1], (4 * H, H), H),
        b_ih=unif(ks[2], (4 * H,), H),
        b_hh=unif(ks[3], (4 * H,), H),
        # mlp: Linear(S+H, m1) -> ReLU -> Linear(m1, m2) -> ReLU -> Linear(m2, 1)
        w1=unif(ks[4], (m1, in_dim), in_dim), b1=unif(ks[5], (m1,), in_dim),
        w2=unif(ks[6], (m2, m1), m1),         b2=unif(ks[7], (m2,), m1),
        w3=unif(ks[8], (m3, m2), m2),         b3=unif(ks[9], (m3,), m2),
    )


def prepare_params(raw, *, self_state_dim, lstm_hidden_dim, seq_len):
    """Kernel layout: gate columns permuted (i,f,g,o)->(i,f,o,g), W_ih expanded
    to a block-diagonal (T*D, T*4H) matrix (hoisted projection, no host-side
    transpose of state), w1 split at the self/hidden boundary, w3 zero-padded
    to 128 lanes for a lane-dense output, matmul weights bf16."""
    H = lstm_hidden_dim
    S = self_state_dim
    T = seq_len
    perm = jnp.concatenate([jnp.arange(0, 2 * H),        # i, f
                            jnp.arange(3 * H, 4 * H),    # o
                            jnp.arange(2 * H, 3 * H)])   # g
    w_ih_t = raw["w_ih"][perm].T                         # (D, 4H)
    w_hh_t = raw["w_hh"][perm].T                         # (H, 4H)
    b_g = (raw["b_ih"] + raw["b_hh"])[perm]
    # Block-diagonal replication: block t maps x_t -> gates_t.
    w_ih_blk = jnp.kron(jnp.eye(T, dtype=w_ih_t.dtype), w_ih_t)   # (T*D, T*4H)
    w1 = raw["w1"]
    w3 = raw["w3"].reshape(-1)                           # (M2,)
    w3_pad = jnp.zeros((w3.shape[0], 128), jnp.float32).at[:, 0].set(w3)
    return dict(
        w_ih_blk=w_ih_blk.astype(jnp.bfloat16),
        w_hh_t=w_hh_t.astype(jnp.bfloat16),
        b_gates=b_g.reshape(1, -1),
        w1_s_t=w1[:, :S].T.astype(jnp.bfloat16),
        w1_h_t=w1[:, S:].T.astype(jnp.bfloat16),
        b1=raw["b1"].reshape(1, -1),
        w2_t=raw["w2"].T.astype(jnp.bfloat16),
        b2=raw["b2"].reshape(1, -1),
        w3_pad=w3_pad.astype(jnp.bfloat16),
        b3_row=jnp.full((1, 128), raw["b3"][0], jnp.float32),
    )


# ----------------------------- pure-JAX reference ---------------------------
def reference_forward(state, raw, *, self_state_dim, lstm_hidden_dim):
    """f32 reference with torch semantics (gate order i,f,g,o, un-split w1)."""
    B, T, D = state.shape
    H = lstm_hidden_dim
    w_ih_t = raw["w_ih"].T
    w_hh_t = raw["w_hh"].T
    b = (raw["b_ih"] + raw["b_hh"])[None, :]
    h = jnp.zeros((B, H), jnp.float32)
    c = jnp.zeros((B, H), jnp.float32)
    for t in range(T):
        gates = state[:, t, :] @ w_ih_t + h @ w_hh_t + b
        i_g = jax.nn.sigmoid(gates[:, :H])
        f_g = jax.nn.sigmoid(gates[:, H:2 * H])
        g_g = jnp.tanh(gates[:, 2 * H:3 * H])
        o_g = jax.nn.sigmoid(gates[:, 3 * H:])
        c = f_g * c + i_g * g_g
        h = o_g * jnp.tanh(c)
    joint = jnp.concatenate([state[:, 0, :self_state_dim], h], axis=1)
    x = jnp.maximum(joint @ raw["w1"].T + raw["b1"], 0.0)
    x = jnp.maximum(x @ raw["w2"].T + raw["b2"], 0.0)
    return x @ raw["w3"].T + raw["b3"]


# ---------------------------------- main ------------------------------------
if __name__ == "__main__":
    # Small shapes consistent with the module: state (batch, n_humans, input_dim)
    batch, n_humans, input_dim = 2, 8, 16
    self_state_dim = 6
    lstm_hidden_dim = 32
    mlp_dims = [64, 32, 1]

    key = jax.random.PRNGKey(0)
    k_state, k_params = jax.random.split(key)
    state = jax.random.normal(k_state, (batch, n_humans, input_dim), jnp.float32)
    raw = init_params(k_params, input_dim, self_state_dim, mlp_dims,
                      lstm_hidden_dim)
    kparams = prepare_params(raw, self_state_dim=self_state_dim,
                             lstm_hidden_dim=lstm_hidden_dim,
                             seq_len=n_humans)

    value = value_network1_forward(
        state, kparams,
        self_state_dim=self_state_dim, lstm_hidden_dim=lstm_hidden_dim)
    value = jax.block_until_ready(value)

    ref = reference_forward(
        state, raw,
        self_state_dim=self_state_dim, lstm_hidden_dim=lstm_hidden_dim)
    assert value.shape == (batch, 1)
    # bf16 inputs / matmul operands (f32 accumulate) -> relaxed tolerance.
    assert jnp.allclose(value, ref, atol=2e-2, rtol=2e-2), (value, ref)

    print("KERNEL_OK")
</pallas_src>

<mosaic_0001>
module attributes {stable_mosaic.version = 11 : i64} {
  func.func @_value_net_kernel(%arg0: i32, %arg1: memref<8x128xbf16, #tpu.memory_space<vmem>>, %arg2: memref<8x6xbf16, #tpu.memory_space<vmem>>, %arg3: memref<128x1024xbf16, #tpu.memory_space<vmem>>, %arg4: memref<32x128xbf16, #tpu.memory_space<vmem>>, %arg5: memref<1x128xf32, #tpu.memory_space<vmem>>, %arg6: memref<6x64xbf16, #tpu.memory_space<vmem>>, %arg7: memref<32x64xbf16, #tpu.memory_space<vmem>>, %arg8: memref<1x64xf32, #tpu.memory_space<vmem>>, %arg9: memref<64x32xbf16, #tpu.memory_space<vmem>>, %arg10: memref<1x32xf32, #tpu.memory_space<vmem>>, %arg11: memref<32x128xbf16, #tpu.memory_space<vmem>>, %arg12: memref<1x128xf32, #tpu.memory_space<vmem>>, %arg13: memref<8x128xf32, #tpu.memory_space<vmem>>, %arg14: memref<8x1024xf32, #tpu.memory_space<vmem>>) attributes {dimension_semantics = [#tpu.dimension_semantics<parallel>], iteration_bounds = array<i64: 1>, scalar_prefetch = 0 : i64, scratch_operands = 1 : i64, tpu.core_type = #tpu.core_type<tc>, window_params = [{transform_indices = @transform_0, window_bounds = array<i64: 8, 128>}, {transform_indices = @transform_1, window_bounds = array<i64: 8, 6>}, {pipeline_mode = #tpu.pipeline_mode<synchronous>, transform_indices = @transform_2, window_bounds = array<i64: 128, 1024>}, {pipeline_mode = #tpu.pipeline_mode<synchronous>, transform_indices = @transform_3, window_bounds = array<i64: 32, 128>}, {pipeline_mode = #tpu.pipeline_mode<synchronous>, transform_indices = @transform_4, window_bounds = array<i64: 1, 128>}, {pipeline_mode = #tpu.pipeline_mode<synchronous>, transform_indices = @transform_5, window_bounds = array<i64: 6, 64>}, {pipeline_mode = #tpu.pipeline_mode<synchronous>, transform_indices = @transform_6, window_bounds = array<i64: 32, 64>}, {pipeline_mode = #tpu.pipeline_mode<synchronous>, transform_indices = @transform_7, window_bounds = array<i64: 1, 64>}, {pipeline_mode = #tpu.pipeline_mode<synchronous>, transform_indices = @transform_8, window_bounds = array<i64: 64, 32>}, {pipeline_mode = #tpu.pipeline_mode<synchronous>, transform_indices = @transform_9, window_bounds = array<i64: 1, 32>}, {pipeline_mode = #tpu.pipeline_mode<synchronous>, transform_indices = @transform_10, window_bounds = array<i64: 32, 128>}, {pipeline_mode = #tpu.pipeline_mode<synchronous>, transform_indices = @transform_11, window_bounds = array<i64: 1, 128>}, {transform_indices = @transform_12, window_bounds = array<i64: 8, 128>}]} {
    %c0 = arith.constant 0 : index
    %c0_0 = arith.constant 0 : index
    %0 = vector.load %arg1[%c0, %c0_0] : memref<8x128xbf16, #tpu.memory_space<vmem>>, vector<8x128xbf16>
    %c0_1 = arith.constant 0 : index
    %c0_2 = arith.constant 0 : index
    %1 = vector.load %arg3[%c0_1, %c0_2] : memref<128x1024xbf16, #tpu.memory_space<vmem>>, vector<128x1024xbf16>
    %cst = arith.constant dense<0.000000e+00> : vector<8x1024xf32>
    %2 = tpu.matmul %0, %1, %cst {dimension_numbers = #tpu.dot_dimension_numbers<[1], [0], [0], [1], [0, 0, 1, 1], [], []>} : vector<8x128xbf16>, vector<128x1024xbf16>, vector<8x1024xf32> -> vector<8x1024xf32>
    %c0_3 = arith.constant 0 : index
    %c0_4 = arith.constant 0 : index
    %3 = vector.load %arg14[%c0_3, %c0_4] : memref<8x1024xf32, #tpu.memory_space<vmem>>, vector<8x1024xf32>
    tpu.vector_store %arg14[%c0_3, %c0_4], %2 {strides = array<i32>} : memref<8x1024xf32, #tpu.memory_space<vmem>>, vector<8x1024xf32>,
    %c0_5 = arith.constant 0 : index
    %c0_6 = arith.constant 0 : index
    %4 = vector.load %arg5[%c0_5, %c0_6] : memref<1x128xf32, #tpu.memory_space<vmem>>, vector<1x128xf32>
    %c0_7 = arith.constant 0 : index
    %c0_8 = arith.constant 0 : index
    %5 = vector.load %arg4[%c0_7, %c0_8] : memref<32x128xbf16, #tpu.memory_space<vmem>>, vector<32x128xbf16>
    %cst_9 = arith.constant 0.000000e+00 : f32
    %6 = vector.broadcast %cst_9 : f32 to vector<8x32xf32>
    %cst_10 = arith.constant 0.000000e+00 : f32
    %7 = vector.broadcast %cst_10 : f32 to vector<8x32xf32>
    %c0_11 = arith.constant 0 : index
    %c0_12 = arith.constant 0 : index
    %8 = vector.load %arg14[%c0_11, %c0_12] : memref<8x1024xf32, #tpu.memory_space<vmem>>, vector<8x128xf32>
    %9 = vector.broadcast %4 : vector<1x128xf32> to vector<8x128xf32>
    %10 = arith.addf %8, %9 : vector<8x128xf32>
    %11 = arith.truncf %6 : vector<8x32xf32> to vector<8x32xbf16>
    %cst_13 = arith.constant dense<0.000000e+00> : vector<8x128xf32>
    %12 = tpu.matmul %11, %5, %cst_13 {dimension_numbers = #tpu.dot_dimension_numbers<[1], [0], [0], [1], [0, 0, 1, 1], [], []>} : vector<8x32xbf16>, vector<32x128xbf16>, vector<8x128xf32> -> vector<8x128xf32>
    %13 = arith.addf %10, %12 : vector<8x128xf32>
    %14 = vector.extract_strided_slice %13 {offsets = [0, 0], sizes = [8, 96], strides = [1, 1]} : vector<8x128xf32> to vector<8x96xf32>
    %15 = arith.negf %14 : vector<8x96xf32>
    %16 = math.exp %15 : vector<8x96xf32>
    %cst_14 = arith.constant 1.000000e+00 : f32
    %17 = vector.broadcast %cst_14 : f32 to vector<8x96xf32>
    %18 = arith.addf %17, %16 : vector<8x96xf32>
    %19 = arith.divf %17, %18 : vector<8x96xf32>
    %20 = vector.extract_strided_slice %13 {offsets = [0, 96], sizes = [8, 32], strides = [1, 1]} : vector<8x128xf32> to vector<8x32xf32>
    %21 = math.tanh %20 : vector<8x32xf32>
    %22 = vector.extract_strided_slice %19 {offsets = [0, 0], sizes = [8, 32], strides = [1, 1]} : vector<8x96xf32> to vector<8x32xf32>
    %23 = vector.extract_strided_slice %19 {offsets = [0, 32], sizes = [8, 32], strides = [1, 1]} : vector<8x96xf32> to vector<8x32xf32>
    %24 = vector.extract_strided_slice %19 {offsets = [0, 64], sizes = [8, 32], strides = [1, 1]} : vector<8x96xf32> to vector<8x32xf32>
    %25 = arith.mulf %23, %7 : vector<8x32xf32>
    %26 = arith.mulf %22, %21 : vector<8x32xf32>
    %27 = arith.addf %25, %26 : vector<8x32xf32>
    %28 = math.tanh %27 : vector<8x32xf32>
    %29 = arith.mulf %24, %28 : vector<8x32xf32>
    %c0_15 = arith.constant 0 : index
    %c128 = arith.constant 128 : index
    %30 = vector.load %arg14[%c0_15, %c128] : memref<8x1024xf32, #tpu.memory_space<vmem>>, vector<8x128xf32>
    %31 = vector.broadcast %4 : vector<1x128xf32> to vector<8x128xf32>
    %32 = arith.addf %30, %31 : vector<8x128xf32>
    %33 = arith.truncf %29 : vector<8x32xf32> to vector<8x32xbf16>
    %cst_16 = arith.constant dense<0.000000e+00> : vector<8x128xf32>
    %34 = tpu.matmul %33, %5, %cst_16 {dimension_numbers = #tpu.dot_dimension_numbers<[1], [0], [0], [1], [0, 0, 1, 1], [], []>} : vector<8x32xbf16>, vector<32x128xbf16>, vector<8x128xf32> -> vector<8x128xf32>
    %35 = arith.addf %32, %34 : vector<8x128xf32>
    %36 = vector.extract_strided_slice %35 {offsets = [0, 0], sizes = [8, 96], strides = [1, 1]} : vector<8x128xf32> to vector<8x96xf32>
    %37 = arith.negf %36 : vector<8x96xf32>
    %38 = math.exp %37 : vector<8x96xf32>
    %cst_17 = arith.constant 1.000000e+00 : f32
    %39 = vector.broadcast %cst_17 : f32 to vector<8x96xf32>
    %40 = arith.addf %39, %38 : vector<8x96xf32>
    %41 = arith.divf %39, %40 : vector<8x96xf32>
    %42 = vector.extract_strided_slice %35 {offsets = [0, 96], sizes = [8, 32], strides = [1, 1]} : vector<8x128xf32> to vector<8x32xf32>
    %43 = math.tanh %42 : vector<8x32xf32>
    %44 = vector.extract_strided_slice %41 {offsets = [0, 0], sizes = [8, 32], strides = [1, 1]} : vector<8x96xf32> to vector<8x32xf32>
    %45 = vector.extract_strided_slice %41 {offsets = [0, 32], sizes = [8, 32], strides = [1, 1]} : vector<8x96xf32> to vector<8x32xf32>
    %46 = vector.extract_strided_slice %41 {offsets = [0, 64], sizes = [8, 32], strides = [1, 1]} : vector<8x96xf32> to vector<8x32xf32>
    %47 = arith.mulf %45, %27 : vector<8x32xf32>
    %48 = arith.mulf %44, %43 : vector<8x32xf32>
    %49 = arith.addf %47, %48 : vector<8x32xf32>
    %50 = math.tanh %49 : vector<8x32xf32>
    %51 = arith.mulf %46, %50 : vector<8x32xf32>
    %c0_18 = arith.constant 0 : index
    %c256 = arith.constant 256 : index
    %52 = vector.load %arg14[%c0_18, %c256] : memref<8x1024xf32, #tpu.memory_space<vmem>>, vector<8x128xf32>
    %53 = vector.broadcast %4 : vector<1x128xf32> to vector<8x128xf32>
    %54 = arith.addf %52, %53 : vector<8x128xf32>
    %55 = arith.truncf %51 : vector<8x32xf32> to vector<8x32xbf16>
    %cst_19 = arith.constant dense<0.000000e+00> : vector<8x128xf32>
    %56 = tpu.matmul %55, %5, %cst_19 {dimension_numbers = #tpu.dot_dimension_numbers<[1], [0], [0], [1], [0, 0, 1, 1], [], []>} : vector<8x32xbf16>, vector<32x128xbf16>, vector<8x128xf32> -> vector<8x128xf32>
    %57 = arith.addf %54, %56 : vector<8x128xf32>
    %58 = vector.extract_strided_slice %57 {offsets = [0, 0], sizes = [8, 96], strides = [1, 1]} : vector<8x128xf32> to vector<8x96xf32>
    %59 = arith.negf %58 : vector<8x96xf32>
    %60 = math.exp %59 : vector<8x96xf32>
    %cst_20 = arith.constant 1.000000e+00 : f32
    %61 = vector.broadcast %cst_20 : f32 to vector<8x96xf32>
    %62 = arith.addf %61, %60 : vector<8x96xf32>
    %63 = arith.divf %61, %62 : vector<8x96xf32>
    %64 = vector.extract_strided_slice %57 {offsets = [0, 96], sizes = [8, 32], strides = [1, 1]} : vector<8x128xf32> to vector<8x32xf32>
    %65 = math.tanh %64 : vector<8x32xf32>
    %66 = vector.extract_strided_slice %63 {offsets = [0, 0], sizes = [8, 32], strides = [1, 1]} : vector<8x96xf32> to vector<8x32xf32>
    %67 = vector.extract_strided_slice %63 {offsets = [0, 32], sizes = [8, 32], strides = [1, 1]} : vector<8x96xf32> to vector<8x32xf32>
    %68 = vector.extract_strided_slice %63 {offsets = [0, 64], sizes = [8, 32], strides = [1, 1]} : vector<8x96xf32> to vector<8x32xf32>
    %69 = arith.mulf %67, %49 : vector<8x32xf32>
    %70 = arith.mulf %66, %65 : vector<8x32xf32>
    %71 = arith.addf %69, %70 : vector<8x32xf32>
    %72 = math.tanh %71 : vector<8x32xf32>
    %73 = arith.mulf %68, %72 : vector<8x32xf32>
    %c0_21 = arith.constant 0 : index
    %c384 = arith.constant 384 : index
    %74 = vector.load %arg14[%c0_21, %c384] : memref<8x1024xf32, #tpu.memory_space<vmem>>, vector<8x128xf32>
    %75 = vector.broadcast %4 : vector<1x128xf32> to vector<8x128xf32>
    %76 = arith.addf %74, %75 : vector<8x128xf32>
    %77 = arith.truncf %73 : vector<8x32xf32> to vector<8x32xbf16>
    %cst_22 = arith.constant dense<0.000000e+00> : vector<8x128xf32>
    %78 = tpu.matmul %77, %5, %cst_22 {dimension_numbers = #tpu.dot_dimension_numbers<[1], [0], [0], [1], [0, 0, 1, 1], [], []>} : vector<8x32xbf16>, vector<32x128xbf16>, vector<8x128xf32> -> vector<8x128xf32>
    %79 = arith.addf %76, %78 : vector<8x128xf32>
    %80 = vector.extract_strided_slice %79 {offsets = [0, 0], sizes = [8, 96], strides = [1, 1]} : vector<8x128xf32> to vector<8x96xf32>
    %81 = arith.negf %80 : vector<8x96xf32>
    %82 = math.exp %81 : vector<8x96xf32>
    %cst_23 = arith.constant 1.000000e+00 : f32
    %83 = vector.broadcast %cst_23 : f32 to vector<8x96xf32>
    %84 = arith.addf %83, %82 : vector<8x96xf32>
    %85 = arith.divf %83, %84 : vector<8x96xf32>
    %86 = vector.extract_strided_slice %79 {offsets = [0, 96], sizes = [8, 32], strides = [1, 1]} : vector<8x128xf32> to vector<8x32xf32>
    %87 = math.tanh %86 : vector<8x32xf32>
    %88 = vector.extract_strided_slice %85 {offsets = [0, 0], sizes = [8, 32], strides = [1, 1]} : vector<8x96xf32> to vector<8x32xf32>
    %89 = vector.extract_strided_slice %85 {offsets = [0, 32], sizes = [8, 32], strides = [1, 1]} : vector<8x96xf32> to vector<8x32xf32>
    %90 = vector.extract_strided_slice %85 {offsets = [0, 64], sizes = [8, 32], strides = [1, 1]} : vector<8x96xf32> to vector<8x32xf32>
    %91 = arith.mulf %89, %71 : vector<8x32xf32>
    %92 = arith.mulf %88, %87 : vector<8x32xf32>
    %93 = arith.addf %91, %92 : vector<8x32xf32>
    %94 = math.tanh %93 : vector<8x32xf32>
    %95 = arith.mulf %90, %94 : vector<8x32xf32>
    %c0_24 = arith.constant 0 : index
    %c512 = arith.constant 512 : index
    %96 = vector.load %arg14[%c0_24, %c512] : memref<8x1024xf32, #tpu.memory_space<vmem>>, vector<8x128xf32>
    %97 = vector.broadcast %4 : vector<1x128xf32> to vector<8x128xf32>
    %98 = arith.addf %96, %97 : vector<8x128xf32>
    %99 = arith.truncf %95 : vector<8x32xf32> to vector<8x32xbf16>
    %cst_25 = arith.constant dense<0.000000e+00> : vector<8x128xf32>
    %100 = tpu.matmul %99, %5, %cst_25 {dimension_numbers = #tpu.dot_dimension_numbers<[1], [0], [0], [1], [0, 0, 1, 1], [], []>} : vector<8x32xbf16>, vector<32x128xbf16>, vector<8x128xf32> -> vector<8x128xf32>
    %101 = arith.addf %98, %100 : vector<8x128xf32>
    %102 = vector.extract_strided_slice %101 {offsets = [0, 0], sizes = [8, 96], strides = [1, 1]} : vector<8x128xf32> to vector<8x96xf32>
    %103 = arith.negf %102 : vector<8x96xf32>
    %104 = math.exp %103 : vector<8x96xf32>
    %cst_26 = arith.constant 1.000000e+00 : f32
    %105 = vector.broadcast %cst_26 : f32 to vector<8x96xf32>
    %106 = arith.addf %105, %104 : vector<8x96xf32>
    %107 = arith.divf %105, %106 : vector<8x96xf32>
    %108 = vector.extract_strided_slice %101 {offsets = [0, 96], sizes = [8, 32], strides = [1, 1]} : vector<8x128xf32> to vector<8x32xf32>
    %109 = math.tanh %108 : vector<8x32xf32>
    %110 = vector.extract_strided_slice %107 {offsets = [0, 0], sizes = [8, 32], strides = [1, 1]} : vector<8x96xf32> to vector<8x32xf32>
    %111 = vector.extract_strided_slice %107 {offsets = [0, 32], sizes = [8, 32], strides = [1, 1]} : vector<8x96xf32> to vector<8x32xf32>
    %112 = vector.extract_strided_slice %107 {offsets = [0, 64], sizes = [8, 32], strides = [1, 1]} : vector<8x96xf32> to vector<8x32xf32>
    %113 = arith.mulf %111, %93 : vector<8x32xf32>
    %114 = arith.mulf %110, %109 : vector<8x32xf32>
    %115 = arith.addf %113, %114 : vector<8x32xf32>
    %116 = math.tanh %115 : vector<8x32xf32>
    %117 = arith.mulf %112, %116 : vector<8x32xf32>
    %c0_27 = arith.constant 0 : index
    %c640 = arith.constant 640 : index
    %118 = vector.load %arg14[%c0_27, %c640] : memref<8x1024xf32, #tpu.memory_space<vmem>>, vector<8x128xf32>
    %119 = vector.broadcast %4 : vector<1x128xf32> to vector<8x128xf32>
    %120 = arith.addf %118, %119 : vector<8x128xf32>
    %121 = arith.truncf %117 : vector<8x32xf32> to vector<8x32xbf16>
    %cst_28 = arith.constant dense<0.000000e+00> : vector<8x128xf32>
    %122 = tpu.matmul %121, %5, %cst_28 {dimension_numbers = #tpu.dot_dimension_numbers<[1], [0], [0], [1], [0, 0, 1, 1], [], []>} : vector<8x32xbf16>, vector<32x128xbf16>, vector<8x128xf32> -> vector<8x128xf32>
    %123 = arith.addf %120, %122 : vector<8x128xf32>
    %124 = vector.extract_strided_slice %123 {offsets = [0, 0], sizes = [8, 96], strides = [1, 1]} : vector<8x128xf32> to vector<8x96xf32>
    %125 = arith.negf %124 : vector<8x96xf32>
    %126 = math.exp %125 : vector<8x96xf32>
    %cst_29 = arith.constant 1.000000e+00 : f32
    %127 = vector.broadcast %cst_29 : f32 to vector<8x96xf32>
    %128 = arith.addf %127, %126 : vector<8x96xf32>
    %129 = arith.divf %127, %128 : vector<8x96xf32>
    %130 = vector.extract_strided_slice %123 {offsets = [0, 96], sizes = [8, 32], strides = [1, 1]} : vector<8x128xf32> to vector<8x32xf32>
    %131 = math.tanh %130 : vector<8x32xf32>
    %132 = vector.extract_strided_slice %129 {offsets = [0, 0], sizes = [8, 32], strides = [1, 1]} : vector<8x96xf32> to vector<8x32xf32>
    %133 = vector.extract_strided_slice %129 {offsets = [0, 32], sizes = [8, 32], strides = [1, 1]} : vector<8x96xf32> to vector<8x32xf32>
    %134 = vector.extract_strided_slice %129 {offsets = [0, 64], sizes = [8, 32], strides = [1, 1]} : vector<8x96xf32> to vector<8x32xf32>
    %135 = arith.mulf %133, %115 : vector<8x32xf32>
    %136 = arith.mulf %132, %131 : vector<8x32xf32>
    %137 = arith.addf %135, %136 : vector<8x32xf32>
    %138 = math.tanh %137 : vector<8x32xf32>
    %139 = arith.mulf %134, %138 : vector<8x32xf32>
    %c0_30 = arith.constant 0 : index
    %c768 = arith.constant 768 : index
    %140 = vector.load %arg14[%c0_30, %c768] : memref<8x1024xf32, #tpu.memory_space<vmem>>, vector<8x128xf32>
    %141 = vector.broadcast %4 : vector<1x128xf32> to vector<8x128xf32>
    %142 = arith.addf %140, %141 : vector<8x128xf32>
    %143 = arith.truncf %139 : vector<8x32xf32> to vector<8x32xbf16>
    %cst_31 = arith.constant dense<0.000000e+00> : vector<8x128xf32>
    %144 = tpu.matmul %143, %5, %cst_31 {dimension_numbers = #tpu.dot_dimension_numbers<[1], [0], [0], [1], [0, 0, 1, 1], [], []>} : vector<8x32xbf16>, vector<32x128xbf16>, vector<8x128xf32> -> vector<8x128xf32>
    %145 = arith.addf %142, %144 : vector<8x128xf32>
    %146 = vector.extract_strided_slice %145 {offsets = [0, 0], sizes = [8, 96], strides = [1, 1]} : vector<8x128xf32> to vector<8x96xf32>
    %147 = arith.negf %146 : vector<8x96xf32>
    %148 = math.exp %147 : vector<8x96xf32>
    %cst_32 = arith.constant 1.000000e+00 : f32
    %149 = vector.broadcast %cst_32 : f32 to vector<8x96xf32>
    %150 = arith.addf %149, %148 : vector<8x96xf32>
    %151 = arith.divf %149, %150 : vector<8x96xf32>
    %152 = vector.extract_strided_slice %145 {offsets = [0, 96], sizes = [8, 32], strides = [1, 1]} : vector<8x128xf32> to vector<8x32xf32>
    %153 = math.tanh %152 : vector<8x32xf32>
    %154 = vector.extract_strided_slice %151 {offsets = [0, 0], sizes = [8, 32], strides = [1, 1]} : vector<8x96xf32> to vector<8x32xf32>
    %155 = vector.extract_strided_slice %151 {offsets = [0, 32], sizes = [8, 32], strides = [1, 1]} : vector<8x96xf32> to vector<8x32xf32>
    %156 = vector.extract_strided_slice %151 {offsets = [0, 64], sizes = [8, 32], strides = [1, 1]} : vector<8x96xf32> to vector<8x32xf32>
    %157 = arith.mulf %155, %137 : vector<8x32xf32>
    %158 = arith.mulf %154, %153 : vector<8x32xf32>
    %159 = arith.addf %157, %158 : vector<8x32xf32>
    %160 = math.tanh %159 : vector<8x32xf32>
    %161 = arith.mulf %156, %160 : vector<8x32xf32>
    %c0_33 = arith.constant 0 : index
    %c896 = arith.constant 896 : index
    %162 = vector.load %arg14[%c0_33, %c896] : memref<8x1024xf32, #tpu.memory_space<vmem>>, vector<8x128xf32>
    %163 = vector.broadcast %4 : vector<1x128xf32> to vector<8x128xf32>
    %164 = arith.addf %162, %163 : vector<8x128xf32>
    %165 = arith.truncf %161 : vector<8x32xf32> to vector<8x32xbf16>
    %cst_34 = arith.constant dense<0.000000e+00> : vector<8x128xf32>
    %166 = tpu.matmul %165, %5, %cst_34 {dimension_numbers = #tpu.dot_dimension_numbers<[1], [0], [0], [1], [0, 0, 1, 1], [], []>} : vector<8x32xbf16>, vector<32x128xbf16>, vector<8x128xf32> -> vector<8x128xf32>
    %167 = arith.addf %164, %166 : vector<8x128xf32>
    %168 = vector.extract_strided_slice %167 {offsets = [0, 0], sizes = [8, 96], strides = [1, 1]} : vector<8x128xf32> to vector<8x96xf32>
    %169 = arith.negf %168 : vector<8x96xf32>
    %170 = math.exp %169 : vector<8x96xf32>
    %cst_35 = arith.constant 1.000000e+00 : f32
    %171 = vector.broadcast %cst_35 : f32 to vector<8x96xf32>
    %172 = arith.addf %171, %170 : vector<8x96xf32>
    %173 = arith.divf %171, %172 : vector<8x96xf32>
    %174 = vector.extract_strided_slice %167 {offsets = [0, 96], sizes = [8, 32], strides = [1, 1]} : vector<8x128xf32> to vector<8x32xf32>
    %175 = math.tanh %174 : vector<8x32xf32>
    %176 = vector.extract_strided_slice %173 {offsets = [0, 0], sizes = [8, 32], strides = [1, 1]} : vector<8x96xf32> to vector<8x32xf32>
    %177 = vector.extract_strided_slice %173 {offsets = [0, 32], sizes = [8, 32], strides = [1, 1]} : vector<8x96xf32> to vector<8x32xf32>
    %178 = vector.extract_strided_slice %173 {offsets = [0, 64], sizes = [8, 32], strides = [1, 1]} : vector<8x96xf32> to vector<8x32xf32>
    %179 = arith.mulf %177, %159 : vector<8x32xf32>
    %180 = arith.mulf %176, %175 : vector<8x32xf32>
    %181 = arith.addf %179, %180 : vector<8x32xf32>
    %182 = math.tanh %181 : vector<8x32xf32>
    %183 = arith.mulf %178, %182 : vector<8x32xf32>
    %c0_36 = arith.constant 0 : index
    %c0_37 = arith.constant 0 : index
    %184 = vector.load %arg2[%c0_36, %c0_37] : memref<8x6xbf16, #tpu.memory_space<vmem>>, vector<8x6xbf16>
    %c0_38 = arith.constant 0 : index
    %c0_39 = arith.constant 0 : index
    %185 = vector.load %arg6[%c0_38, %c0_39] : memref<6x64xbf16, #tpu.memory_space<vmem>>, vector<6x64xbf16>
    %cst_40 = arith.constant dense<0.000000e+00> : vector<8x64xf32>
    %186 = tpu.matmul %184, %185, %cst_40 {dimension_numbers = #tpu.dot_dimension_numbers<[1], [0], [0], [1], [0, 0, 1, 1], [], []>} : vector<8x6xbf16>, vector<6x64xbf16>, vector<8x64xf32> -> vector<8x64xf32>
    %187 = arith.truncf %183 : vector<8x32xf32> to vector<8x32xbf16>
    %c0_41 = arith.constant 0 : index
    %c0_42 = arith.constant 0 : index
    %188 = vector.load %arg7[%c0_41, %c0_42] : memref<32x64xbf16, #tpu.memory_space<vmem>>, vector<32x64xbf16>
    %cst_43 = arith.constant dense<0.000000e+00> : vector<8x64xf32>
    %189 = tpu.matmul %187, %188, %cst_43 {dimension_numbers = #tpu.dot_dimension_numbers<[1], [0], [0], [1], [0, 0, 1, 1], [], []>} : vector<8x32xbf16>, vector<32x64xbf16>, vector<8x64xf32> -> vector<8x64xf32>
    %190 = arith.addf %186, %189 : vector<8x64xf32>
    %c0_44 = arith.constant 0 : index
    %c0_45 = arith.constant 0 : index
    %191 = vector.load %arg8[%c0_44, %c0_45] : memref<1x64xf32, #tpu.memory_space<vmem>>, vector<1x64xf32>
    %192 = vector.broadcast %191 : vector<1x64xf32> to vector<8x64xf32>
    %193 = arith.addf %190, %192 : vector<8x64xf32>
    %cst_46 = arith.constant 0.000000e+00 : f32
    %194 = vector.broadcast %cst_46 : f32 to vector<8x64xf32>
    %195 = arith.maximumf %193, %194 : vector<8x64xf32>
    %196 = arith.truncf %195 : vector<8x64xf32> to vector<8x64xbf16>
    %c0_47 = arith.constant 0 : index
    %c0_48 = arith.constant 0 : index
    %197 = vector.load %arg9[%c0_47, %c0_48] : memref<64x32xbf16, #tpu.memory_space<vmem>>, vector<64x32xbf16>
    %cst_49 = arith.constant dense<0.000000e+00> : vector<8x32xf32>
    %198 = tpu.matmul %196, %197, %cst_49 {dimension_numbers = #tpu.dot_dimension_numbers<[1], [0], [0], [1], [0, 0, 1, 1], [], []>} : vector<8x64xbf16>, vector<64x32xbf16>, vector<8x32xf32> -> vector<8x32xf32>
    %c0_50 = arith.constant 0 : index
    %c0_51 = arith.constant 0 : index
    %199 = vector.load %arg10[%c0_50, %c0_51] : memref<1x32xf32, #tpu.memory_space<vmem>>, vector<1x32xf32>
    %200 = vector.broadcast %199 : vector<1x32xf32> to vector<8x32xf32>
    %201 = arith.addf %198, %200 : vector<8x32xf32>
    %cst_52 = arith.constant 0.000000e+00 : f32
    %202 = vector.broadcast %cst_52 : f32 to vector<8x32xf32>
    %203 = arith.maximumf %201, %202 : vector<8x32xf32>
    %204 = arith.truncf %203 : vector<8x32xf32> to vector<8x32xbf16>
    %c0_53 = arith.constant 0 : index
    %c0_54 = arith.constant 0 : index
    %205 = vector.load %arg11[%c0_53, %c0_54] : memref<32x128xbf16, #tpu.memory_space<vmem>>, vector<32x128xbf16>
    %cst_55 = arith.constant dense<0.000000e+00> : vector<8x128xf32>
    %206 = tpu.matmul %204, %205, %cst_55 {dimension_numbers = #tpu.dot_dimension_numbers<[1], [0], [0], [1], [0, 0, 1, 1], [], []>} : vector<8x32xbf16>, vector<32x128xbf16>, vector<8x128xf32> -> vector<8x128xf32>
    %c0_56 = arith.constant 0 : index
    %c0_57 = arith.constant 0 : index
    %207 = vector.load %arg12[%c0_56, %c0_57] : memref<1x128xf32, #tpu.memory_space<vmem>>, vector<1x128xf32>
    %208 = vector.broadcast %207 : vector<1x128xf32> to vector<8x128xf32>
    %209 = arith.addf %206, %208 : vector<8x128xf32>
    %c0_58 = arith.constant 0 : index
    %c0_59 = arith.constant 0 : index
    %210 = vector.load %arg13[%c0_58, %c0_59] : memref<8x128xf32, #tpu.memory_space<vmem>>, vector<8x128xf32>
    tpu.vector_store %arg13[%c0_58, %c0_59], %209 {strides = array<i32>} : memref<8x128xf32, #tpu.memory_space<vmem>>, vector<8x128xf32>,
    return
  }
  func.func @transform_0(%arg0: i32) -> (i32, i32) {
    %c0_i32 = arith.constant 0 : i32
    %c0_i32_0 = arith.constant 0 : i32
    return %arg0, %c0_i32 : i32, i32
  }
  func.func @transform_1(%arg0: i32) -> (i32, i32) {
    %c0_i32 = arith.constant 0 : i32
    %c0_i32_0 = arith.constant 0 : i32
    return %arg0, %c0_i32 : i32, i32
  }
  func.func @transform_2(%arg0: i32) -> (i32, i32) {
    %c0_i32 = arith.constant 0 : i32
    %c0_i32_0 = arith.constant 0 : i32
    %c0_i32_1 = arith.constant 0 : i32
    return %c0_i32, %c0_i32_0 : i32, i32
  }
  func.func @transform_3(%arg0: i32) -> (i32, i32) {
    %c0_i32 = arith.constant 0 : i32
    %c0_i32_0 = arith.constant 0 : i32
    %c0_i32_1 = arith.constant 0 : i32
    return %c0_i32, %c0_i32_0 : i32, i32
  }
  func.func @transform_4(%arg0: i32) -> (i32, i32) {
    %c0_i32 = arith.constant 0 : i32
    %c0_i32_0 = arith.constant 0 : i32
    %c0_i32_1 = arith.constant 0 : i32
    return %c0_i32, %c0_i32_0 : i32, i32
  }
  func.func @transform_5(%arg0: i32) -> (i32, i32) {
    %c0_i32 = arith.constant 0 : i32
    %c0_i32_0 = arith.constant 0 : i32
    %c0_i32_1 = arith.constant 0 : i32
    return %c0_i32, %c0_i32_0 : i32, i32
  }
  func.func @transform_6(%arg0: i32) -> (i32, i32) {
    %c0_i32 = arith.constant 0 : i32
    %c0_i32_0 = arith.constant 0 : i32
    %c0_i32_1 = arith.constant 0 : i32
    return %c0_i32, %c0_i32_0 : i32, i32
  }
  func.func @transform_7(%arg0: i32) -> (i32, i32) {
    %c0_i32 = arith.constant 0 : i32
    %c0_i32_0 = arith.constant 0 : i32
    %c0_i32_1 = arith.constant 0 : i32
    return %c0_i32, %c0_i32_0 : i32, i32
  }
  func.func @transform_8(%arg0: i32) -> (i32, i32) {
    %c0_i32 = arith.constant 0 : i32
    %c0_i32_0 = arith.constant 0 : i32
    %c0_i32_1 = arith.constant 0 : i32
    return %c0_i32, %c0_i32_0 : i32, i32
  }
  func.func @transform_9(%arg0: i32) -> (i32, i32) {
    %c0_i32 = arith.constant 0 : i32
    %c0_i32_0 = arith.constant 0 : i32
    %c0_i32_1 = arith.constant 0 : i32
    return %c0_i32, %c0_i32_0 : i32, i32
  }
  func.func @transform_10(%arg0: i32) -> (i32, i32) {
    %c0_i32 = arith.constant 0 : i32
    %c0_i32_0 = arith.constant 0 : i32
    %c0_i32_1 = arith.constant 0 : i32
    return %c0_i32, %c0_i32_0 : i32, i32
  }
  func.func @transform_11(%arg0: i32) -> (i32, i32) {
    %c0_i32 = arith.constant 0 : i32
    %c0_i32_0 = arith.constant 0 : i32
    %c0_i32_1 = arith.constant 0 : i32
    return %c0_i32, %c0_i32_0 : i32, i32
  }
  func.func @transform_12(%arg0: i32) -> (i32, i32) {
    %c0_i32 = arith.constant 0 : i32
    %c0_i32_0 = arith.constant 0 : i32
    return %arg0, %c0_i32 : i32, i32
  }
}

</mosaic_0001>

<llo_original>
// kernel: tpu_custom_call.1
$region0: #{tpu_custom_call.1}
  #allocation0 [shape = 'u32[]', space=smem, size = 0x4, offset = 0x4, fixed_abs, tag = 'smem constant byte address 0x4 - core index']
  #allocation1 [shape = 'u32[144,128]{1,0:T(1,128)}', space=vmem, size = 0x12000, scoped, tag = 'internal scratch']
  #allocation2 [shape = 'f32[8,1024]{1,0:T(8,128)}', space=vmem, size = 0x8000, scoped, tag = 'scratch operand']
  %s0 = inlined_call_operand.hbm [shape: bf16[8,128], index: 0, kind: input, shape index: {}]
  %s1 = inlined_call_operand.hbm [shape: bf16[8,6], index: 1, kind: input, shape index: {}]
  %s2 = inlined_call_operand.hbm [shape: bf16[128,1024], index: 2, kind: input, shape index: {}]
  %s3 = inlined_call_operand.vmem [shape: bf16[32,128], index: 3, kind: input, shape index: {}]
  %s4 = inlined_call_operand.vmem [shape: f32[1,128], index: 4, kind: input, shape index: {}]
  %s5 = inlined_call_operand.vmem [shape: bf16[6,64], index: 5, kind: input, shape index: {}]
  %s6 = inlined_call_operand.vmem [shape: bf16[32,64], index: 6, kind: input, shape index: {}]
  %s7 = inlined_call_operand.vmem [shape: f32[1,64], index: 7, kind: input, shape index: {}]
  %s8 = inlined_call_operand.vmem [shape: bf16[64,32], index: 8, kind: input, shape index: {}]
  %s9 = inlined_call_operand.vmem [shape: f32[1,32], index: 9, kind: input, shape index: {}]
  %s10 = inlined_call_operand.vmem [shape: bf16[32,128], index: 10, kind: input, shape index: {}]
  %s11 = inlined_call_operand.vmem [shape: f32[1,128], index: 11, kind: input, shape index: {}]
  %s12 = inlined_call_operand.hbm [shape: f32[8,128], index: 12, kind: output, shape index: {}]
  %s13 = sld [smem:[#allocation0]]
  $region70: #{tpu_custom_call.1} parent=0
    _
  %s15 = ssub.s32 1, %s13
  %s16 = scalar_select 0, %s15, %s13
  $region1: #{tpu_custom_call.1} parent=0
    #allocation3 [shape = 'u8[2048]{0}', space=vmem, size = 0x800, scoped, tag = 'input window, operand 0, single buffered']
    #allocation4 [shape = 's32[1]{0}', space=sflag, size = 0x4, scoped, tag = 'scoped memory for tpu_custom_call.1']
    #allocation5 [shape = 's32[1]{0}', space=sflag, size = 0x4, scoped, tag = 'scoped memory for tpu_custom_call.1']
    #allocation6 [shape = 'u8[2048]{0}', space=vmem, size = 0x800, scoped, tag = 'input window, operand 1, single buffered']
    #allocation7 [shape = 's32[1]{0}', space=sflag, size = 0x4, scoped, tag = 'scoped memory for tpu_custom_call.1']
    #allocation8 [shape = 'u8[262144]{0}', space=vmem, size = 0x40000, scoped, tag = 'input window, operand 2, single buffered']
    #allocation9 [shape = 'u8[4096]{0}', space=vmem, size = 0x1000, scoped, tag = 'output window, operand 0, single buffered']
    %17 = vsyncpa [#allocation4], 0
    %18 = vsyncpa [#allocation7], 0
    %19 = vsyncpa [#allocation5], 0
    // Predicated region
    $region2: #{tpu_custom_call.1} parent=1 // pred_check
      _
    $region3: #{tpu_custom_call.1} parent=1 // pred_check_branch
      %21 = sbr.rel (0) target = $region5
    $region4: #{tpu_custom_call.1} parent=1 // pred_region
      %s23 = ssub.s32 64, 64
      %24 = vsyncadd [#allocation4], %s23
      %s26 = sshll.u32 [#allocation3], 4
      %s27 = int_to_ptr.vmem [resolvable:$true] %s26
      %29 = dma.hbm_to_vmem [thread:$0]  %s0, 64, %s27, [#allocation4]
    $region5: #{tpu_custom_call.1} parent=1 // pred_fallthru
      _
    // Predicated region
    $region6: #{tpu_custom_call.1} parent=1 // pred_check
      _
    $region7: #{tpu_custom_call.1} parent=1 // pred_check_branch
      %31 = sbr.rel (0) target = $region9
    $region8: #{tpu_custom_call.1} parent=1 // pred_region
      %s33 = ssub.s32 64, 64
      %34 = vsyncadd [#allocation7], %s33
      %s36 = sshll.u32 [#allocation6], 4
      %s37 = int_to_ptr.vmem [resolvable:$true] %s36
      %39 = dma.hbm_to_vmem [thread:$0]  %s1, 64, %s37, [#allocation7]
    $region9: #{tpu_custom_call.1} parent=1 // pred_fallthru
      _
    // Predicated region
    $region10: #{tpu_custom_call.1} parent=1 // pred_check
      _
    $region11: #{tpu_custom_call.1} parent=1 // pred_check_branch
      %41 = sbr.rel (0) target = $region13
    $region12: #{tpu_custom_call.1} parent=1 // pred_region
      %s43 = ssub.s32 8192, 8192
      %44 = vsyncadd [#allocation7], %s43
      %s45 = sshll.u32 [#allocation8], 4
      %s46 = int_to_ptr.vmem [resolvable:$true] %s45
      %51 = dma.hbm_to_vmem [thread:$0]  %s2, 8192, %s46, [#allocation7], 512, 512, 32
    $region13: #{tpu_custom_call.1} parent=1 // pred_fallthru
      _
    // Predicated region
    $region14: #{tpu_custom_call.1} parent=1 // pred_check
      _
    $region15: #{tpu_custom_call.1} parent=1 // pred_check_branch
      %53 = sbr.rel (0) target = $region17
    $region16: #{tpu_custom_call.1} parent=1 // pred_region
      _
    $region17: #{tpu_custom_call.1} parent=1 // pred_fallthru
      _
    // Predicated region
    $region18: #{tpu_custom_call.1} parent=1 // pred_check
      _
    $region19: #{tpu_custom_call.1} parent=1 // pred_check_branch
      %55 = sbr.rel (0) target = $region21
    $region20: #{tpu_custom_call.1} parent=1 // pred_region
      _
    $region21: #{tpu_custom_call.1} parent=1 // pred_fallthru
      _
    // Predicated region
    $region22: #{tpu_custom_call.1} parent=1 // pred_check
      _
    $region23: #{tpu_custom_call.1} parent=1 // pred_check_branch
      %57 = sbr.rel (0) target = $region25
    $region24: #{tpu_custom_call.1} parent=1 // pred_region
      _
    $region25: #{tpu_custom_call.1} parent=1 // pred_fallthru
      _
    // Predicated region
    $region26: #{tpu_custom_call.1} parent=1 // pred_check
      _
    $region27: #{tpu_custom_call.1} parent=1 // pred_check_branch
      %59 = sbr.rel (0) target = $region29
    $region28: #{tpu_custom_call.1} parent=1 // pred_region
      _
    $region29: #{tpu_custom_call.1} parent=1 // pred_fallthru
      _
    // Predicated region
    $region30: #{tpu_custom_call.1} parent=1 // pred_check
      _
    $region31: #{tpu_custom_call.1} parent=1 // pred_check_branch
      %61 = sbr.rel (0) target = $region33
    $region32: #{tpu_custom_call.1} parent=1 // pred_region
      _
    $region33: #{tpu_custom_call.1} parent=1 // pred_fallthru
      _
    // Predicated region
    $region34: #{tpu_custom_call.1} parent=1 // pred_check
      _
    $region35: #{tpu_custom_call.1} parent=1 // pred_check_branch
      %63 = sbr.rel (0) target = $region37
    $region36: #{tpu_custom_call.1} parent=1 // pred_region
      _
    $region37: #{tpu_custom_call.1} parent=1 // pred_fallthru
      _
    // Predicated region
    $region38: #{tpu_custom_call.1} parent=1 // pred_check
      _
    $region39: #{tpu_custom_call.1} parent=1 // pred_check_branch
      %65 = sbr.rel (0) target = $region41
    $region40: #{tpu_custom_call.1} parent=1 // pred_region
      _
    $region41: #{tpu_custom_call.1} parent=1 // pred_fallthru
      _
    // Predicated region
    $region42: #{tpu_custom_call.1} parent=1 // pred_check
      _
    $region43: #{tpu_custom_call.1} parent=1 // pred_check_branch
      %67 = sbr.rel (0) target = $region45
    $region44: #{tpu_custom_call.1} parent=1 // pred_region
      _
    $region45: #{tpu_custom_call.1} parent=1 // pred_fallthru
      _
    // Predicated region
    $region46: #{tpu_custom_call.1} parent=1 // pred_check
      _
    $region47: #{tpu_custom_call.1} parent=1 // pred_check_branch
      %69 = sbr.rel (0) target = $region49
    $region48: #{tpu_custom_call.1} parent=1 // pred_region
      _
    $region49: #{tpu_custom_call.1} parent=1 // pred_fallthru
      _
    // Predicated region
    $region50: #{tpu_custom_call.1} parent=1 // pred_check
      _
    $region51: #{tpu_custom_call.1} parent=1 // pred_check_branch
      %71 = sbr.rel (0) target = $region53
    $region52: #{tpu_custom_call.1} parent=1 // pred_region
      %72 = dma.done [#allocation4], 64
    $region53: #{tpu_custom_call.1} parent=1 // pred_fallthru
      _
    // Predicated region
    $region54: #{tpu_custom_call.1} parent=1 // pred_check
      _
    $region55: #{tpu_custom_call.1} parent=1 // pred_check_branch
      %74 = sbr.rel (0) target = $region57
    $region56: #{tpu_custom_call.1} parent=1 // pred_region
      %75 = dma.done [#allocation7], 64
    $region57: #{tpu_custom_call.1} parent=1 // pred_fallthru
      _
    // Predicated region
    $region58: #{tpu_custom_call.1} parent=1 // pred_check
      _
    $region59: #{tpu_custom_call.1} parent=1 // pred_check_branch
      %77 = sbr.rel (0) target = $region61
    $region60: #{tpu_custom_call.1} parent=1 // pred_region
      %78 = dma.done [#allocation7], 8192
    $region61: #{tpu_custom_call.1} parent=1 // pred_fallthru
      _
    %v80 = vld [vmem:[#allocation3] sm:$0xf]
    %v81 = vld [vmem:[#allocation8] sm:$0xff]
    %v82 = vld [vmem:[#allocation8 + $0x8] sm:$0xff]
    %v83 = vld [vmem:[#allocation8 + $0x10] sm:$0xff]
    %v84 = vld [vmem:[#allocation8 + $0x18] sm:$0xff]
    %v85 = vld [vmem:[#allocation8 + $0x20] sm:$0xff]
    %v86 = vld [vmem:[#allocation8 + $0x28] sm:$0xff]
    %v87 = vld [vmem:[#allocation8 + $0x30] sm:$0xff]
    %v88 = vld [vmem:[#allocation8 + $0x38] sm:$0xff]
    %v89 = vld [vmem:[#allocation8 + $0x40] sm:$0xff]
    %v90 = vld [vmem:[#allocation8 + $0x48] sm:$0xff]
    %v91 = vld [vmem:[#allocation8 + $0x50] sm:$0xff]
    %v92 = vld [vmem:[#allocation8 + $0x58] sm:$0xff]
    %v93 = vld [vmem:[#allocation8 + $0x60] sm:$0xff]
    %v94 = vld [vmem:[#allocation8 + $0x68] sm:$0xff]
    %v95 = vld [vmem:[#allocation8 + $0x70] sm:$0xff]
    %v96 = vld [vmem:[#allocation8 + $0x78] sm:$0xff]
    %v97 = vld [vmem:[#allocation8 + $0x80] sm:$0xff]
    %v98 = vld [vmem:[#allocation8 + $0x88] sm:$0xff]
    %v99 = vld [vmem:[#allocation8 + $0x90] sm:$0xff]
    %v100 = vld [vmem:[#allocation8 + $0x98] sm:$0xff]
    %v101 = vld [vmem:[#allocation8 + $0xa0] sm:$0xff]
    %v102 = vld [vmem:[#allocation8 + $0xa8] sm:$0xff]
    %v103 = vld [vmem:[#allocation8 + $0xb0] sm:$0xff]
    %v104 = vld [vmem:[#allocation8 + $0xb8] sm:$0xff]
    %v105 = vld [vmem:[#allocation8 + $0xc0] sm:$0xff]
    %v106 = vld [vmem:[#allocation8 + $0xc8] sm:$0xff]
    %v107 = vld [vmem:[#allocation8 + $0xd0] sm:$0xff]
    %v108 = vld [vmem:[#allocation8 + $0xd8] sm:$0xff]
    %v109 = vld [vmem:[#allocation8 + $0xe0] sm:$0xff]
    %v110 = vld [vmem:[#allocation8 + $0xe8] sm:$0xff]
    %v111 = vld [vmem:[#allocation8 + $0xf0] sm:$0xff]
    %v112 = vld [vmem:[#allocation8 + $0xf8] sm:$0xff]
    %v113 = vld [vmem:[#allocation8 + $0x100] sm:$0xff]
    %v114 = vld [vmem:[#allocation8 + $0x108] sm:$0xff]
    %v115 = vld [vmem:[#allocation8 + $0x110] sm:$0xff]
    %v116 = vld [vmem:[#allocation8 + $0x118] sm:$0xff]
    %v117 = vld [vmem:[#allocation8 + $0x120] sm:$0xff]
    %v118 = vld [vmem:[#allocation8 + $0x128] sm:$0xff]
    %v119 = vld [vmem:[#allocation8 + $0x130] sm:$0xff]
    %v120 = vld [vmem:[#allocation8 + $0x138] sm:$0xff]
    %v121 = vld [vmem:[#allocation8 + $0x140] sm:$0xff]
    %v122 = vld [vmem:[#allocation8 + $0x148] sm:$0xff]
    %v123 = vld [vmem:[#allocation8 + $0x150] sm:$0xff]
    %v124 = vld [vmem:[#allocation8 + $0x158] sm:$0xff]
    %v125 = vld [vmem:[#allocation8 + $0x160] sm:$0xff]
    %v126 = vld [vmem:[#allocation8 + $0x168] sm:$0xff]
    %v127 = vld [vmem:[#allocation8 + $0x170] sm:$0xff]
    %v128 = vld [vmem:[#allocation8 + $0x178] sm:$0xff]
    %v129 = vld [vmem:[#allocation8 + $0x180] sm:$0xff]
    %v130 = vld [vmem:[#allocation8 + $0x188] sm:$0xff]
    %v131 = vld [vmem:[#allocation8 + $0x190] sm:$0xff]
    %v132 = vld [vmem:[#allocation8 + $0x198] sm:$0xff]
    %v133 = vld [vmem:[#allocation8 + $0x1a0] sm:$0xff]
    %v134 = vld [vmem:[#allocation8 + $0x1a8] sm:$0xff]
    %v135 = vld [vmem:[#allocation8 + $0x1b0] sm:$0xff]
    %v136 = vld [vmem:[#allocation8 + $0x1b8] sm:$0xff]
    %v137 = vld [vmem:[#allocation8 + $0x1c0] sm:$0xff]
    %v138 = vld [vmem:[#allocation8 + $0x1c8] sm:$0xff]
    %v139 = vld [vmem:[#allocation8 + $0x1d0] sm:$0xff]
    %v140 = vld [vmem:[#allocation8 + $0x1d8] sm:$0xff]
    %v141 = vld [vmem:[#allocation8 + $0x1e0] sm:$0xff]
    %v142 = vld [vmem:[#allocation8 + $0x1e8] sm:$0xff]
    %v143 = vld [vmem:[#allocation8 + $0x1f0] sm:$0xff]
    %v144 = vld [vmem:[#allocation8 + $0x1f8] sm:$0xff]
    %v209 = vunpack.c.l.b16 %v81
    %v210 = vunpack.c.h.b16 %v81
    %v211 = vunpack.c.l.b16 %v82
    %v212 = vunpack.c.h.b16 %v82
    %v213 = vunpack.c.l.b16 %v83
    %v214 = vunpack.c.h.b16 %v83
    %v215 = vunpack.c.l.b16 %v84
    %v216 = vunpack.c.h.b16 %v84
    %v217 = vunpack.c.l.b16 %v85
    %v218 = vunpack.c.h.b16 %v85
    %v219 = vunpack.c.l.b16 %v86
    %v220 = vunpack.c.h.b16 %v86
    %v221 = vunpack.c.l.b16 %v87
    %v222 = vunpack.c.h.b16 %v87
    %v223 = vunpack.c.l.b16 %v88
    %v224 = vunpack.c.h.b16 %v88
    %v225 = vunpack.c.l.b16 %v89
    %v226 = vunpack.c.h.b16 %v89
    %v227 = vunpack.c.l.b16 %v90
    %v228 = vunpack.c.h.b16 %v90
    %v229 = vunpack.c.l.b16 %v91
    %v230 = vunpack.c.h.b16 %v91
    %v231 = vunpack.c.l.b16 %v92
    %v232 = vunpack.c.h.b16 %v92
    %v233 = vunpack.c.l.b16 %v93
    %v234 = vunpack.c.h.b16 %v93
    %v235 = vunpack.c.l.b16 %v94
    %v236 = vunpack.c.h.b16 %v94
    %v237 = vunpack.c.l.b16 %v95
    %v238 = vunpack.c.h.b16 %v95
    %v239 = vunpack.c.l.b16 %v96
    %v240 = vunpack.c.h.b16 %v96
    %v241 = vunpack.c.l.b16 %v97
    %v242 = vunpack.c.h.b16 %v97
    %v243 = vunpack.c.l.b16 %v98
    %v244 = vunpack.c.h.b16 %v98
    %v245 = vunpack.c.l.b16 %v99
    %v246 = vunpack.c.h.b16 %v99
    %v247 = vunpack.c.l.b16 %v100
    %v248 = vunpack.c.h.b16 %v100
    %v249 = vunpack.c.l.b16 %v101
    %v250 = vunpack.c.h.b16 %v101
    %v251 = vunpack.c.l.b16 %v102
    %v252 = vunpack.c.h.b16 %v102
    %v253 = vunpack.c.l.b16 %v103
    %v254 = vunpack.c.h.b16 %v103
    %v255 = vunpack.c.l.b16 %v104
    %v256 = vunpack.c.h.b16 %v104
    %v257 = vunpack.c.l.b16 %v105
    %v258 = vunpack.c.h.b16 %v105
    %v259 = vunpack.c.l.b16 %v106
    %v260 = vunpack.c.h.b16 %v106
    %v261 = vunpack.c.l.b16 %v107
    %v262 = vunpack.c.h.b16 %v107
    %v263 = vunpack.c.l.b16 %v108
    %v264 = vunpack.c.h.b16 %v108
    %v265 = vunpack.c.l.b16 %v109
    %v266 = vunpack.c.h.b16 %v109
    %v267 = vunpack.c.l.b16 %v110
    %v268 = vunpack.c.h.b16 %v110
    %v269 = vunpack.c.l.b16 %v111
    %v270 = vunpack.c.h.b16 %v111
    %v271 = vunpack.c.l.b16 %v112
    %v272 = vunpack.c.h.b16 %v112
    %v273 = vunpack.c.l.b16 %v113
    %v274 = vunpack.c.h.b16 %v113
    %v275 = vunpack.c.l.b16 %v114
    %v276 = vunpack.c.h.b16 %v114
    %v277 = vunpack.c.l.b16 %v115
    %v278 = vunpack.c.h.b16 %v115
    %v279 = vunpack.c.l.b16 %v116
    %v280 = vunpack.c.h.b16 %v116
    %v281 = vunpack.c.l.b16 %v117
    %v282 = vunpack.c.h.b16 %v117
    %v283 = vunpack.c.l.b16 %v118
    %v284 = vunpack.c.h.b16 %v118
    %v285 = vunpack.c.l.b16 %v119
    %v286 = vunpack.c.h.b16 %v119
    %v287 = vunpack.c.l.b16 %v120
    %v288 = vunpack.c.h.b16 %v120
    %v289 = vunpack.c.l.b16 %v121
    %v290 = vunpack.c.h.b16 %v121
    %v291 = vunpack.c.l.b16 %v122
    %v292 = vunpack.c.h.b16 %v122
    %v293 = vunpack.c.l.b16 %v123
    %v294 = vunpack.c.h.b16 %v123
    %v295 = vunpack.c.l.b16 %v124
    %v296 = vunpack.c.h.b16 %v124
    %v297 = vunpack.c.l.b16 %v125
    %v298 = vunpack.c.h.b16 %v125
    %v299 = vunpack.c.l.b16 %v126
    %v300 = vunpack.c.h.b16 %v126
    %v301 = vunpack.c.l.b16 %v127
    %v302 = vunpack.c.h.b16 %v127
    %v303 = vunpack.c.l.b16 %v128
    %v304 = vunpack.c.h.b16 %v128
    %v305 = vunpack.c.l.b16 %v129
    %v306 = vunpack.c.h.b16 %v129
    %v307 = vunpack.c.l.b16 %v130
    %v308 = vunpack.c.h.b16 %v130
    %v309 = vunpack.c.l.b16 %v131
    %v310 = vunpack.c.h.b16 %v131
    %v311 = vunpack.c.l.b16 %v132
    %v312 = vunpack.c.h.b16 %v132
    %v313 = vunpack.c.l.b16 %v133
    %v314 = vunpack.c.h.b16 %v133
    %v315 = vunpack.c.l.b16 %v134
    %v316 = vunpack.c.h.b16 %v134
    %v317 = vunpack.c.l.b16 %v135
    %v318 = vunpack.c.h.b16 %v135
    %v319 = vunpack.c.l.b16 %v136
    %v320 = vunpack.c.h.b16 %v136
    %v321 = vunpack.c.l.b16 %v137
    %v322 = vunpack.c.h.b16 %v137
    %v323 = vunpack.c.l.b16 %v138
    %v324 = vunpack.c.h.b16 %v138
    %v325 = vunpack.c.l.b16 %v139
    %v326 = vunpack.c.h.b16 %v139
    %v327 = vunpack.c.l.b16 %v140
    %v328 = vunpack.c.h.b16 %v140
    %v329 = vunpack.c.l.b16 %v141
    %v330 = vunpack.c.h.b16 %v141
    %v331 = vunpack.c.l.b16 %v142
    %v332 = vunpack.c.h.b16 %v142
    %v333 = vunpack.c.l.b16 %v143
    %v334 = vunpack.c.h.b16 %v143
    %v335 = vunpack.c.l.b16 %v144
    %v336 = vunpack.c.h.b16 %v144
    %v337 = vpack.c.b16 %v217, %v209
    %v338 = vpack.c.b16 %v218, %v210
    %v339 = vpack.c.b16 %v219, %v211
    %v340 = vpack.c.b16 %v220, %v212
    %v341 = vpack.c.b16 %v221, %v213
    %v342 = vpack.c.b16 %v222, %v214
    %v343 = vpack.c.b16 %v223, %v215
    %v344 = vpack.c.b16 %v224, %v216
    %v345 = vpack.c.b16 %v233, %v225
    %v346 = vpack.c.b16 %v234, %v226
    %v347 = vpack.c.b16 %v235, %v227
    %v348 = vpack.c.b16 %v236, %v228
    %v349 = vpack.c.b16 %v237, %v229
    %v350 = vpack.c.b16 %v238, %v230
    %v351 = vpack.c.b16 %v239, %v231
    %v352 = vpack.c.b16 %v240, %v232
    %v353 = vpack.c.b16 %v249, %v241
    %v354 = vpack.c.b16 %v250, %v242
    %v355 = vpack.c.b16 %v251, %v243
    %v356 = vpack.c.b16 %v252, %v244
    %v357 = vpack.c.b16 %v253, %v245
    %v358 = vpack.c.b16 %v254, %v246
    %v359 = vpack.c.b16 %v255, %v247
    %v360 = vpack.c.b16 %v256, %v248
    %v361 = vpack.c.b16 %v265, %v257
    %v362 = vpack.c.b16 %v266, %v258
    %v363 = vpack.c.b16 %v267, %v259
    %v364 = vpack.c.b16 %v268, %v260
    %v365 = vpack.c.b16 %v269, %v261
    %v366 = vpack.c.b16 %v270, %v262
    %v367 = vpack.c.b16 %v271, %v263
    %v368 = vpack.c.b16 %v272, %v264
    %v369 = vpack.c.b16 %v281, %v273
    %v370 = vpack.c.b16 %v282, %v274
    %v371 = vpack.c.b16 %v283, %v275
    %v372 = vpack.c.b16 %v284, %v276
    %v373 = vpack.c.b16 %v285, %v277
    %v374 = vpack.c.b16 %v286, %v278
    %v375 = vpack.c.b16 %v287, %v279
    %v376 = vpack.c.b16 %v288, %v280
    %v377 = vpack.c.b16 %v297, %v289
    %v378 = vpack.c.b16 %v298, %v290
    %v379 = vpack.c.b16 %v299, %v291
    %v380 = vpack.c.b16 %v300, %v292
    %v381 = vpack.c.b16 %v301, %v293
    %v382 = vpack.c.b16 %v302, %v294
    %v383 = vpack.c.b16 %v303, %v295
    %v384 = vpack.c.b16 %v304, %v296
    %v385 = vpack.c.b16 %v313, %v305
    %v386 = vpack.c.b16 %v314, %v306
    %v387 = vpack.c.b16 %v315, %v307
    %v388 = vpack.c.b16 %v316, %v308
    %v389 = vpack.c.b16 %v317, %v309
    %v390 = vpack.c.b16 %v318, %v310
    %v391 = vpack.c.b16 %v319, %v311
    %v392 = vpack.c.b16 %v320, %v312
    %v393 = vpack.c.b16 %v329, %v321
    %v394 = vpack.c.b16 %v330, %v322
    %v395 = vpack.c.b16 %v331, %v323
    %v396 = vpack.c.b16 %v332, %v324
    %v397 = vpack.c.b16 %v333, %v325
    %v398 = vpack.c.b16 %v334, %v326
    %v399 = vpack.c.b16 %v335, %v327
    %v400 = vpack.c.b16 %v336, %v328
    %465 = vmatprep.subr.bf16.mxu0 %v394
    %466 = vmatpush1.bf16.msra.mxu0 %v393
    %467 = vmatprep.subr.bf16.mxu0 %v386
    %468 = vmatpush1.bf16.msra.mxu0 %v385
    %469 = vmatprep.subr.bf16.mxu0 %v378
    %470 = vmatpush1.bf16.msra.mxu0 %v377
    %471 = vmatprep.subr.bf16.mxu0 %v370
    %472 = vmatpush1.bf16.msra.mxu0 %v369
    %473 = vmatprep.subr.bf16.mxu0 %v362
    %474 = vmatpush1.bf16.msra.mxu0 %v361
    %475 = vmatprep.subr.bf16.mxu0 %v354
    %476 = vmatpush1.bf16.msra.mxu0 %v353
    %477 = vmatprep.subr.bf16.mxu0 %v346
    %478 = vmatpush1.bf16.msra.mxu0 %v345
    %479 = vmatprep.subr.bf16.mxu0 %v338
    %480 = vmatpush1.bf16.msra.mxu0 %v337
    %481 = vmatprep.subr.bf16.mxu0 0
    %482 = vmatpush2.bf16.msra.mxu0 0
    %483 = vmatprep.subr.bf16.mxu0 0
    %484 = vmatpush2.bf16.msra.mxu0 0
    %485 = vmatprep.subr.bf16.mxu0 0
    %486 = vmatpush2.bf16.msra.mxu0 0
    %487 = vmatprep.subr.bf16.mxu0 0
    %488 = vmatpush2.bf16.msra.mxu0 0
    %489 = vmatprep.subr.bf16.mxu0 0
    %490 = vmatpush2.bf16.msra.mxu0 0
    %491 = vmatprep.subr.bf16.mxu0 0
    %492 = vmatpush2.bf16.msra.mxu0 0
    %493 = vmatprep.subr.bf16.mxu0 0
    %494 = vmatpush2.bf16.msra.mxu0 0
    %495 = vmatprep.subr.bf16.mxu0 0
    %496 = vmatpush2.bf16.msra.mxu0 0
    %497 = vmatprep.mubr.bf16.mxu0 0
    %498 = vmatmul.mubr.bf16.gmra.mxu0 %v80
    %v499 = vpop.f32.mrf.mxu0
    %v500 = vadd.f32 0.0, %v499
    %v501 = vpop.f32.mrf.mxu0
    %v502 = vadd.f32 0.0, %v501
    %v503 = vpop.f32.mrf.mxu0
    %v504 = vpop.f32.mrf.mxu0
    %505 = vdwg.mxu0
    %506 = vmatprep.subr.bf16.mxu0 %v396
    %507 = vmatpush1.bf16.msra.mxu0 %v395
    %508 = vmatprep.subr.bf16.mxu0 %v388
    %509 = vmatpush1.bf16.msra.mxu0 %v387
    %510 = vmatprep.subr.bf16.mxu0 %v380
    %511 = vmatpush1.bf16.msra.mxu0 %v379
    %512 = vmatprep.subr.bf16.mxu0 %v372
    %513 = vmatpush1.bf16.msra.mxu0 %v371
    %514 = vmatprep.subr.bf16.mxu0 %v364
    %515 = vmatpush1.bf16.msra.mxu0 %v363
    %516 = vmatprep.subr.bf16.mxu0 %v356
    %517 = vmatpush1.bf16.msra.mxu0 %v355
    %518 = vmatprep.subr.bf16.mxu0 %v348
    %519 = vmatpush1.bf16.msra.mxu0 %v347
    %520 = vmatprep.subr.bf16.mxu0 %v340
    %521 = vmatpush1.bf16.msra.mxu0 %v339
    %522 = vmatprep.subr.bf16.mxu0 0
    %523 = vmatpush2.bf16.msra.mxu0 0
    %524 = vmatprep.subr.bf16.mxu0 0
    %525 = vmatpush2.bf16.msra.mxu0 0
    %526 = vmatprep.subr.bf16.mxu0 0
    %527 = vmatpush2.bf16.msra.mxu0 0
    %528 = vmatprep.subr.bf16.mxu0 0
    %529 = vmatpush2.bf16.msra.mxu0 0
    %530 = vmatprep.subr.bf16.mxu0 0
    %531 = vmatpush2.bf16.msra.mxu0 0
    %532 = vmatprep.subr.bf16.mxu0 0
    %533 = vmatpush2.bf16.msra.mxu0 0
    %534 = vmatprep.subr.bf16.mxu0 0
    %535 = vmatpush2.bf16.msra.mxu0 0
    %536 = vmatprep.subr.bf16.mxu0 0
    %537 = vmatpush2.bf16.msra.mxu0 0
    %538 = vmatprep.mubr.bf16.mxu0 0
    %539 = vmatmul.mubr.bf16.gmra.mxu0 %v80
    %v540 = vpop.f32.mrf.mxu0
    %v541 = vadd.f32 0.0, %v540
    %v542 = vpop.f32.mrf.mxu0
    %v543 = vadd.f32 0.0, %v542
    %v544 = vpop.f32.mrf.mxu0
    %v545 = vpop.f32.mrf.mxu0
    %546 = vdwg.mxu0
    %547 = vmatprep.subr.bf16.mxu0 %v398
    %548 = vmatpush1.bf16.msra.mxu0 %v397
    %549 = vmatprep.subr.bf16.mxu0 %v390
    %550 = vmatpush1.bf16.msra.mxu0 %v389
    %551 = vmatprep.subr.bf16.mxu0 %v382
    %552 = vmatpush1.bf16.msra.mxu0 %v381
    %553 = vmatprep.subr.bf16.mxu0 %v374
    %554 = vmatpush1.bf16.msra.mxu0 %v373
    %555 = vmatprep.subr.bf16.mxu0 %v366
    %556 = vmatpush1.bf16.msra.mxu0 %v365
    %557 = vmatprep.subr.bf16.mxu0 %v358
    %558 = vmatpush1.bf16.msra.mxu0 %v357
    %559 = vmatprep.subr.bf16.mxu0 %v350
    %560 = vmatpush1.bf16.msra.mxu0 %v349
    %561 = vmatprep.subr.bf16.mxu0 %v342
    %562 = vmatpush1.bf16.msra.mxu0 %v341
    %563 = vmatprep.subr.bf16.mxu0 0
    %564 = vmatpush2.bf16.msra.mxu0 0
    %565 = vmatprep.subr.bf16.mxu0 0
    %566 = vmatpush2.bf16.msra.mxu0 0
    %567 = vmatprep.subr.bf16.mxu0 0
    %568 = vmatpush2.bf16.msra.mxu0 0
    %569 = vmatprep.subr.bf16.mxu0 0
    %570 = vmatpush2.bf16.msra.mxu0 0
    %571 = vmatprep.subr.bf16.mxu0 0
    %572 = vmatpush2.bf16.msra.mxu0 0
    %573 = vmatprep.subr.bf16.mxu0 0
    %574 = vmatpush2.bf16.msra.mxu0 0
    %575 = vmatprep.subr.bf16.mxu0 0
    %576 = vmatpush2.bf16.msra.mxu0 0
    %577 = vmatprep.subr.bf16.mxu0 0
    %578 = vmatpush2.bf16.msra.mxu0 0
    %579 = vmatprep.mubr.bf16.mxu0 0
    %580 = vmatmul.mubr.bf16.gmra.mxu0 %v80
    %v581 = vpop.f32.mrf.mxu0
    %v582 = vadd.f32 0.0, %v581
    %v583 = vpop.f32.mrf.mxu0
    %v584 = vadd.f32 0.0, %v583
    %v585 = vpop.f32.mrf.mxu0
    %v586 = vpop.f32.mrf.mxu0
    %587 = vdwg.mxu0
    %588 = vmatprep.subr.bf16.mxu0 %v400
    %589 = vmatpush1.bf16.msra.mxu0 %v399
    %590 = vmatprep.subr.bf16.mxu0 %v392
    %591 = vmatpush1.bf16.msra.mxu0 %v391
    %592 = vmatprep.subr.bf16.mxu0 %v384
    %593 = vmatpush1.bf16.msra.mxu0 %v383
    %594 = vmatprep.subr.bf16.mxu0 %v376
    %595 = vmatpush1.bf16.msra.mxu0 %v375
    %596 = vmatprep.subr.bf16.mxu0 %v368
    %597 = vmatpush1.bf16.msra.mxu0 %v367
    %598 = vmatprep.subr.bf16.mxu0 %v360
    %599 = vmatpush1.bf16.msra.mxu0 %v359
    %600 = vmatprep.subr.bf16.mxu0 %v352
    %601 = vmatpush1.bf16.msra.mxu0 %v351
    %602 = vmatprep.subr.bf16.mxu0 %v344
    %603 = vmatpush1.bf16.msra.mxu0 %v343
    %604 = vmatprep.subr.bf16.mxu0 0
    %605 = vmatpush2.bf16.msra.mxu0 0
    %606 = vmatprep.subr.bf16.mxu0 0
    %607 = vmatpush2.bf16.msra.mxu0 0
    %608 = vmatprep.subr.bf16.mxu0 0
    %609 = vmatpush2.bf16.msra.mxu0 0
    %610 = vmatprep.subr.bf16.mxu0 0
    %611 = vmatpush2.bf16.msra.mxu0 0
    %612 = vmatprep.subr.bf16.mxu0 0
    %613 = vmatpush2.bf16.msra.mxu0 0
    %614 = vmatprep.subr.bf16.mxu0 0
    %615 = vmatpush2.bf16.msra.mxu0 0
    %616 = vmatprep.subr.bf16.mxu0 0
    %617 = vmatpush2.bf16.msra.mxu0 0
    %618 = vmatprep.subr.bf16.mxu0 0
    %619 = vmatpush2.bf16.msra.mxu0 0
    %620 = vmatprep.mubr.bf16.mxu0 0
    %621 = vmatmul.mubr.bf16.gmra.mxu0 %v80
    %v622 = vpop.f32.mrf.mxu0
    %v623 = vadd.f32 0.0, %v622
    %v624 = vpop.f32.mrf.mxu0
    %v625 = vadd.f32 0.0, %v624
    %v626 = vpop.f32.mrf.mxu0
    %v627 = vpop.f32.mrf.mxu0
    %628 = vdwg.mxu0
    %629 = vst [vmem:[#allocation2] sm:$0xff] %v500
    %630 = vst [vmem:[#allocation2 + $0x8] sm:$0xff] %v502
    %631 = vst [vmem:[#allocation2 + $0x10] sm:$0xff] %v541
    %632 = vst [vmem:[#allocation2 + $0x18] sm:$0xff] %v543
    %633 = vst [vmem:[#allocation2 + $0x20] sm:$0xff] %v582
    %634 = vst [vmem:[#allocation2 + $0x28] sm:$0xff] %v584
    %635 = vst [vmem:[#allocation2 + $0x30] sm:$0xff] %v623
    %636 = vst [vmem:[#allocation2 + $0x38] sm:$0xff] %v625
    %v637 = vld [vmem:[%s4] sm:$0x1]
    %v638 = vld [vmem:[%s3] sm:$0xf]
    %v639 = vld [vmem:[%s3 + $0x4] sm:$0xf]
    %v640 = vld [vmem:[%s3 + $0x8] sm:$0xf]
    %v641 = vld [vmem:[%s3 + $0xc] sm:$0xf]
    %v642 = vld [vmem:[#allocation2] sm:$0xff]
    %v644 = vlaneseq
    %v645 = vshrl.u32 %v644, 7
    %v646 = vsub.s32 0, %v645
    %v647 = vrot.slane %v637, %v646
    %v649 = vadd.f32 %v642, %v647
    %v654 = vunpack.c.l.b16 %v638
    %v655 = vunpack.c.l.b16 %v639
    %v656 = vunpack.c.l.b16 %v640
    %v657 = vunpack.c.l.b16 %v641
    %v658 = vpack.c.b16 %v655, %v654
    %v659 = vpack.c.b16 %v657, %v656
    %vm662 = vcmask 261120
    %v664 = vsel %vm662, 0, 0
    %666 = vmatprep.subr.bf16.mxu0 0
    %667 = vmatpush1.bf16.msra.mxu0 0
    %668 = vmatprep.subr.bf16.mxu0 0
    %669 = vmatpush1.bf16.msra.mxu0 0
    %670 = vmatprep.subr.bf16.mxu0 0
    %671 = vmatpush1.bf16.msra.mxu0 0
    %672 = vmatprep.subr.bf16.mxu0 0
    %673 = vmatpush1.bf16.msra.mxu0 0
    %674 = vmatprep.subr.bf16.mxu0 0
    %675 = vmatpush1.bf16.msra.mxu0 0
    %676 = vmatprep.subr.bf16.mxu0 0
    %677 = vmatpush1.bf16.msra.mxu0 0
    %678 = vmatprep.subr.bf16.mxu0 0
    %679 = vmatpush1.bf16.msra.mxu0 %v659
    %680 = vmatprep.subr.bf16.mxu0 0
    %681 = vmatpush1.bf16.msra.mxu0 %v658
    %682 = vmatprep.subr.bf16.mxu0 0
    %683 = vmatpush2.bf16.msra.mxu0 0
    %684 = vmatprep.subr.bf16.mxu0 0
    %685 = vmatpush2.bf16.msra.mxu0 0
    %686 = vmatprep.subr.bf16.mxu0 0
    %687 = vmatpush2.bf16.msra.mxu0 0
    %688 = vmatprep.subr.bf16.mxu0 0
    %689 = vmatpush2.bf16.msra.mxu0 0
    %690 = vmatprep.subr.bf16.mxu0 0
    %691 = vmatpush2.bf16.msra.mxu0 0
    %692 = vmatprep.subr.bf16.mxu0 0
    %693 = vmatpush2.bf16.msra.mxu0 0
    %694 = vmatprep.subr.bf16.mxu0 0
    %695 = vmatpush2.bf16.msra.mxu0 0
    %696 = vmatprep.subr.bf16.mxu0 0
    %697 = vmatpush2.bf16.msra.mxu0 0
    %698 = vmatprep.mubr.bf16.mxu0 0
    %699 = vmatmul.mubr.bf16.gmra.mxu0 %v664
    %v700 = vpop.f32.mrf.mxu0
    %v701 = vadd.f32 0.0, %v700
    %v702 = vpop.f32.mrf.mxu0
    %v703 = vpop.f32.mrf.mxu0
    %v704 = vpop.f32.mrf.mxu0
    %705 = vdwg.mxu0
    %v706 = vadd.f32 %v649, %v701
    %v707 = vxor.u32 %v706, 2147483648
    %v708 = vmul.f32 %v707, 1.442695
    %v709 = vpow.pop %v708
    %v710 = vadd.f32 %v709, 1.0
    %v711 = vrcp.pop %v710
    %v712 = vmul.f32 1.0, %v711
    %v713 = vtanh.pop %v706
    %v714 = vmul.f32 %v712, 0.0
    %716 = vrot.lane.b32.xlu0 %v713, 32
    %v717 = vpop.permute.xlu0 %716
    %v719 = vmul.f32 %v712, %v717
    %721 = vrot.lane.b32.xlu0 %v719, 32
    %v722 = vpop.permute.xlu0 %721
    %v724 = vadd.f32 %v714, %v722
    %v725 = vtanh.pop %v724
    %727 = vrot.lane.b32.xlu0 %v725, 32
    %v728 = vpop.permute.xlu0 %727
    %v730 = vmul.f32 %v712, %v728
    %v731 = vld [vmem:[#allocation2 + $0x8] sm:$0xff]
    %v732 = vadd.f32 %v731, %v647
    %v733 = vpack.c.bf16 %v730, %v730
    %735 = vrot.lane.b32.xlu0 %v733, 64
    %v736 = vpop.permute.xlu0 %735
    %v738 = vsel %vm662, %v736, 0
    %740 = vmatprep.subr.bf16.mxu0 0
    %741 = vmatpush1.bf16.msra.mxu0 0
    %742 = vmatprep.subr.bf16.mxu0 0
    %743 = vmatpush1.bf16.msra.mxu0 0
    %744 = vmatprep.subr.bf16.mxu0 0
    %745 = vmatpush1.bf16.msra.mxu0 0
    %746 = vmatprep.subr.bf16.mxu0 0
    %747 = vmatpush1.bf16.msra.mxu0 0
    %748 = vmatprep.subr.bf16.mxu0 0
    %749 = vmatpush1.bf16.msra.mxu0 0
    %750 = vmatprep.subr.bf16.mxu0 0
    %751 = vmatpush1.bf16.msra.mxu0 0
    %752 = vmatprep.subr.bf16.mxu0 0
    %753 = vmatpush1.bf16.msra.mxu0 %v659
    %754 = vmatprep.subr.bf16.mxu0 0
    %755 = vmatpush1.bf16.msra.mxu0 %v658
    %756 = vmatprep.subr.bf16.mxu0 0
    %757 = vmatpush2.bf16.msra.mxu0 0
    %758 = vmatprep.subr.bf16.mxu0 0
    %759 = vmatpush2.bf16.msra.mxu0 0
    %760 = vmatprep.subr.bf16.mxu0 0
    %761 = vmatpush2.bf16.msra.mxu0 0
    %762 = vmatprep.subr.bf16.mxu0 0
    %763 = vmatpush2.bf16.msra.mxu0 0
    %764 = vmatprep.subr.bf16.mxu0 0
    %765 = vmatpush2.bf16.msra.mxu0 0
    %766 = vmatprep.subr.bf16.mxu0 0
    %767 = vmatpush2.bf16.msra.mxu0 0
    %768 = vmatprep.subr.bf16.mxu0 0
    %769 = vmatpush2.bf16.msra.mxu0 0
    %770 = vmatprep.subr.bf16.mxu0 0
    %771 = vmatpush2.bf16.msra.mxu0 0
    %772 = vmatprep.mubr.bf16.mxu0 0
    %773 = vmatmul.mubr.bf16.gmra.mxu0 %v738
    %v774 = vpop.f32.mrf.mxu0
    %v775 = vadd.f32 0.0, %v774
    %v776 = vpop.f32.mrf.mxu0
    %v777 = vpop.f32.mrf.mxu0
    %v778 = vpop.f32.mrf.mxu0
    %779 = vdwg.mxu0
    %v780 = vadd.f32 %v732, %v775
    %v781 = vxor.u32 %v780, 2147483648
    %v782 = vmul.f32 %v781, 1.442695
    %v783 = vpow.pop %v782
    %v784 = vadd.f32 %v783, 1.0
    %v785 = vrcp.pop %v784
    %v786 = vmul.f32 1.0, %v785
    %v787 = vtanh.pop %v780
    %v788 = vmul.f32 %v786, %v724
    %790 = vrot.lane.b32.xlu0 %v787, 32
    %v791 = vpop.permute.xlu0 %790
    %v793 = vmul.f32 %v786, %v791
    %795 = vrot.lane.b32.xlu0 %v793, 32
    %v796 = vpop.permute.xlu0 %795
    %v798 = vadd.f32 %v788, %v796
    %v799 = vtanh.pop %v798
    %801 = vrot.lane.b32.xlu0 %v799, 32
    %v802 = vpop.permute.xlu0 %801
    %v804 = vmul.f32 %v786, %v802
    %v805 = vld [vmem:[#allocation2 + $0x10] sm:$0xff]
    %v806 = vadd.f32 %v805, %v647
    %v807 = vpack.c.bf16 %v804, %v804
    %809 = vrot.lane.b32.xlu0 %v807, 64
    %v810 = vpop.permute.xlu0 %809
    %v812 = vsel %vm662, %v810, 0
    %814 = vmatprep.subr.bf16.mxu0 0
    %815 = vmatpush1.bf16.msra.mxu0 0
    %816 = vmatprep.subr.bf16.mxu0 0
    %817 = vmatpush1.bf16.msra.mxu0 0
    %818 = vmatprep.subr.bf16.mxu0 0
    %819 = vmatpush1.bf16.msra.mxu0 0
    %820 = vmatprep.subr.bf16.mxu0 0
    %821 = vmatpush1.bf16.msra.mxu0 0
    %822 = vmatprep.subr.bf16.mxu0 0
    %823 = vmatpush1.bf16.msra.mxu0 0
    %824 = vmatprep.subr.bf16.mxu0 0
    %825 = vmatpush1.bf16.msra.mxu0 0
    %826 = vmatprep.subr.bf16.mxu0 0
    %827 = vmatpush1.bf16.msra.mxu0 %v659
    %828 = vmatprep.subr.bf16.mxu0 0
    %829 = vmatpush1.bf16.msra.mxu0 %v658
    %830 = vmatprep.subr.bf16.mxu0 0
    %831 = vmatpush2.bf16.msra.mxu0 0
    %832 = vmatprep.subr.bf16.mxu0 0
    %833 = vmatpush2.bf16.msra.mxu0 0
    %834 = vmatprep.subr.bf16.mxu0 0
    %835 = vmatpush2.bf16.msra.mxu0 0
    %836 = vmatprep.subr.bf16.mxu0 0
    %837 = vmatpush2.bf16.msra.mxu0 0
    %838 = vmatprep.subr.bf16.mxu0 0
    %839 = vmatpush2.bf16.msra.mxu0 0
    %840 = vmatprep.subr.bf16.mxu0 0
    %841 = vmatpush2.bf16.msra.mxu0 0
    %842 = vmatprep.subr.bf16.mxu0 0
    %843 = vmatpush2.bf16.msra.mxu0 0
    %844 = vmatprep.subr.bf16.mxu0 0
    %845 = vmatpush2.bf16.msra.mxu0 0
    %846 = vmatprep.mubr.bf16.mxu0 0
    %847 = vmatmul.mubr.bf16.gmra.mxu0 %v812
    %v848 = vpop.f32.mrf.mxu0
    %v849 = vadd.f32 0.0, %v848
    %v850 = vpop.f32.mrf.mxu0
    %v851 = vpop.f32.mrf.mxu0
    %v852 = vpop.f32.mrf.mxu0
    %853 = vdwg.mxu0
    %v854 = vadd.f32 %v806, %v849
    %v855 = vxor.u32 %v854, 2147483648
    %v856 = vmul.f32 %v855, 1.442695
    %v857 = vpow.pop %v856
    %v858 = vadd.f32 %v857, 1.0
    %v859 = vrcp.pop %v858
    %v860 = vmul.f32 1.0, %v859
    %v861 = vtanh.pop %v854
    %v862 = vmul.f32 %v860, %v798
    %864 = vrot.lane.b32.xlu0 %v861, 32
    %v865 = vpop.permute.xlu0 %864
    %v867 = vmul.f32 %v860, %v865
    %869 = vrot.lane.b32.xlu0 %v867, 32
    %v870 = vpop.permute.xlu0 %869
    %v872 = vadd.f32 %v862, %v870
    %v873 = vtanh.pop %v872
    %875 = vrot.lane.b32.xlu0 %v873, 32
    %v876 = vpop.permute.xlu0 %875
    %v878 = vmul.f32 %v860, %v876
    %v879 = vld [vmem:[#allocation2 + $0x18] sm:$0xff]
    %v880 = vadd.f32 %v879, %v647
    %v881 = vpack.c.bf16 %v878, %v878
    %883 = vrot.lane.b32.xlu0 %v881, 64
    %v884 = vpop.permute.xlu0 %883
    %v886 = vsel %vm662, %v884, 0
    %888 = vmatprep.subr.bf16.mxu0 0
    %889 = vmatpush1.bf16.msra.mxu0 0
    %890 = vmatprep.subr.bf16.mxu0 0
    %891 = vmatpush1.bf16.msra.mxu0 0
    %892 = vmatprep.subr.bf16.mxu0 0
    %893 = vmatpush1.bf16.msra.mxu0 0
    %894 = vmatprep.subr.bf16.mxu0 0
    %895 = vmatpush1.bf16.msra.mxu0 0
    %896 = vmatprep.subr.bf16.mxu0 0
    %897 = vmatpush1.bf16.msra.mxu0 0
    %898 = vmatprep.subr.bf16.mxu0 0
    %899 = vmatpush1.bf16.msra.mxu0 0
    %900 = vmatprep.subr.bf16.mxu0 0
    %901 = vmatpush1.bf16.msra.mxu0 %v659
    %902 = vmatprep.subr.bf16.mxu0 0
    %903 = vmatpush1.bf16.msra.mxu0 %v658
    %904 = vmatprep.subr.bf16.mxu0 0
    %905 = vmatpush2.bf16.msra.mxu0 0
    %906 = vmatprep.subr.bf16.mxu0 0
    %907 = vmatpush2.bf16.msra.mxu0 0
    %908 = vmatprep.subr.bf16.mxu0 0
    %909 = vmatpush2.bf16.msra.mxu0 0
    %910 = vmatprep.subr.bf16.mxu0 0
    %911 = vmatpush2.bf16.msra.mxu0 0
    %912 = vmatprep.subr.bf16.mxu0 0
    %913 = vmatpush2.bf16.msra.mxu0 0
    %914 = vmatprep.subr.bf16.mxu0 0
    %915 = vmatpush2.bf16.msra.mxu0 0
    %916 = vmatprep.subr.bf16.mxu0 0
    %917 = vmatpush2.bf16.msra.mxu0 0
    %918 = vmatprep.subr.bf16.mxu0 0
    %919 = vmatpush2.bf16.msra.mxu0 0
    %920 = vmatprep.mubr.bf16.mxu0 0
    %921 = vmatmul.mubr.bf16.gmra.mxu0 %v886
    %v922 = vpop.f32.mrf.mxu0
    %v923 = vadd.f32 0.0, %v922
    %v924 = vpop.f32.mrf.mxu0
    %v925 = vpop.f32.mrf.mxu0
    %v926 = vpop.f32.mrf.mxu0
    %927 = vdwg.mxu0
    %v928 = vadd.f32 %v880, %v923
    %v929 = vxor.u32 %v928, 2147483648
    %v930 = vmul.f32 %v929, 1.442695
    %v931 = vpow.pop %v930
    %v932 = vadd.f32 %v931, 1.0
    %v933 = vrcp.pop %v932
    %v934 = vmul.f32 1.0, %v933
    %v935 = vtanh.pop %v928
    %v936 = vmul.f32 %v934, %v872
    %938 = vrot.lane.b32.xlu0 %v935, 32
    %v939 = vpop.permute.xlu0 %938
    %v941 = vmul.f32 %v934, %v939
    %943 = vrot.lane.b32.xlu0 %v941, 32
    %v944 = vpop.permute.xlu0 %943
    %v946 = vadd.f32 %v936, %v944
    %v947 = vtanh.pop %v946
    %949 = vrot.lane.b32.xlu0 %v947, 32
    %v950 = vpop.permute.xlu0 %949
    %v952 = vmul.f32 %v934, %v950
    %v953 = vld [vmem:[#allocation2 + $0x20] sm:$0xff]
    %v954 = vadd.f32 %v953, %v647
    %v955 = vpack.c.bf16 %v952, %v952
    %957 = vrot.lane.b32.xlu0 %v955, 64
    %v958 = vpop.permute.xlu0 %957
    %v960 = vsel %vm662, %v958, 0
    %962 = vmatprep.subr.bf16.mxu0 0
    %963 = vmatpush1.bf16.msra.mxu0 0
    %964 = vmatprep.subr.bf16.mxu0 0
    %965 = vmatpush1.bf16.msra.mxu0 0
    %966 = vmatprep.subr.bf16.mxu0 0
    %967 = vmatpush1.bf16.msra.mxu0 0
    %968 = vmatprep.subr.bf16.mxu0 0
    %969 = vmatpush1.bf16.msra.mxu0 0
    %970 = vmatprep.subr.bf16.mxu0 0
    %971 = vmatpush1.bf16.msra.mxu0 0
    %972 = vmatprep.subr.bf16.mxu0 0
    %973 = vmatpush1.bf16.msra.mxu0 0
    %974 = vmatprep.subr.bf16.mxu0 0
    %975 = vmatpush1.bf16.msra.mxu0 %v659
    %976 = vmatprep.subr.bf16.mxu0 0
    %977 = vmatpush1.bf16.msra.mxu0 %v658
    %978 = vmatprep.subr.bf16.mxu0 0
    %979 = vmatpush2.bf16.msra.mxu0 0
    %980 = vmatprep.subr.bf16.mxu0 0
    %981 = vmatpush2.bf16.msra.mxu0 0
    %982 = vmatprep.subr.bf16.mxu0 0
    %983 = vmatpush2.bf16.msra.mxu0 0
    %984 = vmatprep.subr.bf16.mxu0 0
    %985 = vmatpush2.bf16.msra.mxu0 0
    %986 = vmatprep.subr.bf16.mxu0 0
    %987 = vmatpush2.bf16.msra.mxu0 0
    %988 = vmatprep.subr.bf16.mxu0 0
    %989 = vmatpush2.bf16.msra.mxu0 0
    %990 = vmatprep.subr.bf16.mxu0 0
    %991 = vmatpush2.bf16.msra.mxu0 0
    %992 = vmatprep.subr.bf16.mxu0 0
    %993 = vmatpush2.bf16.msra.mxu0 0
    %994 = vmatprep.mubr.bf16.mxu0 0
    %995 = vmatmul.mubr.bf16.gmra.mxu0 %v960
    %v996 = vpop.f32.mrf.mxu0
    %v997 = vadd.f32 0.0, %v996
    %v998 = vpop.f32.mrf.mxu0
    %v999 = vpop.f32.mrf.mxu0
    %v1000 = vpop.f32.mrf.mxu0
    %1001 = vdwg.mxu0
    %v1002 = vadd.f32 %v954, %v997
    %v1003 = vxor.u32 %v1002, 2147483648
    %v1004 = vmul.f32 %v1003, 1.442695
    %v1005 = vpow.pop %v1004
    %v1006 = vadd.f32 %v1005, 1.0
    %v1007 = vrcp.pop %v1006
    %v1008 = vmul.f32 1.0, %v1007
    %v1009 = vtanh.pop %v1002
    %v1010 = vmul.f32 %v1008, %v946
    %1012 = vrot.lane.b32.xlu0 %v1009, 32
    %v1013 = vpop.permute.xlu0 %1012
    %v1015 = vmul.f32 %v1008, %v1013
    %1017 = vrot.lane.b32.xlu0 %v1015, 32
    %v1018 = vpop.permute.xlu0 %1017
    %v1020 = vadd.f32 %v1010, %v1018
    %v1021 = vtanh.pop %v1020
    %1023 = vrot.lane.b32.xlu0 %v1021, 32
    %v1024 = vpop.permute.xlu0 %1023
    %v1026 = vmul.f32 %v1008, %v1024
    %v1027 = vld [vmem:[#allocation2 + $0x28] sm:$0xff]
    %v1028 = vadd.f32 %v1027, %v647
    %v1029 = vpack.c.bf16 %v1026, %v1026
    %1031 = vrot.lane.b32.xlu0 %v1029, 64
    %v1032 = vpop.permute.xlu0 %1031
    %v1034 = vsel %vm662, %v1032, 0
    %1036 = vmatprep.subr.bf16.mxu0 0
    %1037 = vmatpush1.bf16.msra.mxu0 0
    %1038 = vmatprep.subr.bf16.mxu0 0
    %1039 = vmatpush1.bf16.msra.mxu0 0
    %1040 = vmatprep.subr.bf16.mxu0 0
    %1041 = vmatpush1.bf16.msra.mxu0 0
    %1042 = vmatprep.subr.bf16.mxu0 0
    %1043 = vmatpush1.bf16.msra.mxu0 0
    %1044 = vmatprep.subr.bf16.mxu0 0
    %1045 = vmatpush1.bf16.msra.mxu0 0
    %1046 = vmatprep.subr.bf16.mxu0 0
    %1047 = vmatpush1.bf16.msra.mxu0 0
    %1048 = vmatprep.subr.bf16.mxu0 0
    %1049 = vmatpush1.bf16.msra.mxu0 %v659
    %1050 = vmatprep.subr.bf16.mxu0 0
    %1051 = vmatpush1.bf16.msra.mxu0 %v658
    %1052 = vmatprep.subr.bf16.mxu0 0
    %1053 = vmatpush2.bf16.msra.mxu0 0
    %1054 = vmatprep.subr.bf16.mxu0 0
    %1055 = vmatpush2.bf16.msra.mxu0 0
    %1056 = vmatprep.subr.bf16.mxu0 0
    %1057 = vmatpush2.bf16.msra.mxu0 0
    %1058 = vmatprep.subr.bf16.mxu0 0
    %1059 = vmatpush2.bf16.msra.mxu0 0
    %1060 = vmatprep.subr.bf16.mxu0 0
    %1061 = vmatpush2.bf16.msra.mxu0 0
    %1062 = vmatprep.subr.bf16.mxu0 0
    %1063 = vmatpush2.bf16.msra.mxu0 0
    %1064 = vmatprep.subr.bf16.mxu0 0
    %1065 = vmatpush2.bf16.msra.mxu0 0
    %1066 = vmatprep.subr.bf16.mxu0 0
    %1067 = vmatpush2.bf16.msra.mxu0 0
    %1068 = vmatprep.mubr.bf16.mxu0 0
    %1069 = vmatmul.mubr.bf16.gmra.mxu0 %v1034
    %v1070 = vpop.f32.mrf.mxu0
    %v1071 = vadd.f32 0.0, %v1070
    %v1072 = vpop.f32.mrf.mxu0
    %v1073 = vpop.f32.mrf.mxu0
    %v1074 = vpop.f32.mrf.mxu0
    %1075 = vdwg.mxu0
    %v1076 = vadd.f32 %v1028, %v1071
    %v1077 = vxor.u32 %v1076, 2147483648
    %v1078 = vmul.f32 %v1077, 1.442695
    %v1079 = vpow.pop %v1078
    %v1080 = vadd.f32 %v1079, 1.0
    %v1081 = vrcp.pop %v1080
    %v1082 = vmul.f32 1.0, %v1081
    %v1083 = vtanh.pop %v1076
    %v1084 = vmul.f32 %v1082, %v1020
    %1086 = vrot.lane.b32.xlu0 %v1083, 32
    %v1087 = vpop.permute.xlu0 %1086
    %v1089 = vmul.f32 %v1082, %v1087
    %1091 = vrot.lane.b32.xlu0 %v1089, 32
    %v1092 = vpop.permute.xlu0 %1091
    %v1094 = vadd.f32 %v1084, %v1092
    %v1095 = vtanh.pop %v1094
    %1097 = vrot.lane.b32.xlu0 %v1095, 32
    %v1098 = vpop.permute.xlu0 %1097
    %v1100 = vmul.f32 %v1082, %v1098
    %v1101 = vld [vmem:[#allocation2 + $0x30] sm:$0xff]
    %v1102 = vadd.f32 %v1101, %v647
    %v1103 = vpack.c.bf16 %v1100, %v1100
    %1105 = vrot.lane.b32.xlu0 %v1103, 64
    %v1106 = vpop.permute.xlu0 %1105
    %v1108 = vsel %vm662, %v1106, 0
    %1110 = vmatprep.subr.bf16.mxu0 0
    %1111 = vmatpush1.bf16.msra.mxu0 0
    %1112 = vmatprep.subr.bf16.mxu0 0
    %1113 = vmatpush1.bf16.msra.mxu0 0
    %1114 = vmatprep.subr.bf16.mxu0 0
    %1115 = vmatpush1.bf16.msra.mxu0 0
    %1116 = vmatprep.subr.bf16.mxu0 0
    %1117 = vmatpush1.bf16.msra.mxu0 0
    %1118 = vmatprep.subr.bf16.mxu0 0
    %1119 = vmatpush1.bf16.msra.mxu0 0
    %1120 = vmatprep.subr.bf16.mxu0 0
    %1121 = vmatpush1.bf16.msra.mxu0 0
    %1122 = vmatprep.subr.bf16.mxu0 0
    %1123 = vmatpush1.bf16.msra.mxu0 %v659
    %1124 = vmatprep.subr.bf16.mxu0 0
    %1125 = vmatpush1.bf16.msra.mxu0 %v658
    %1126 = vmatprep.subr.bf16.mxu0 0
    %1127 = vmatpush2.bf16.msra.mxu0 0
    %1128 = vmatprep.subr.bf16.mxu0 0
    %1129 = vmatpush2.bf16.msra.mxu0 0
    %1130 = vmatprep.subr.bf16.mxu0 0
    %1131 = vmatpush2.bf16.msra.mxu0 0
    %1132 = vmatprep.subr.bf16.mxu0 0
    %1133 = vmatpush2.bf16.msra.mxu0 0
    %1134 = vmatprep.subr.bf16.mxu0 0
    %1135 = vmatpush2.bf16.msra.mxu0 0
    %1136 = vmatprep.subr.bf16.mxu0 0
    %1137 = vmatpush2.bf16.msra.mxu0 0
    %1138 = vmatprep.subr.bf16.mxu0 0
    %1139 = vmatpush2.bf16.msra.mxu0 0
    %1140 = vmatprep.subr.bf16.mxu0 0
    %1141 = vmatpush2.bf16.msra.mxu0 0
    %1142 = vmatprep.mubr.bf16.mxu0 0
    %1143 = vmatmul.mubr.bf16.gmra.mxu0 %v1108
    %v1144 = vpop.f32.mrf.mxu0
    %v1145 = vadd.f32 0.0, %v1144
    %v1146 = vpop.f32.mrf.mxu0
    %v1147 = vpop.f32.mrf.mxu0
    %v1148 = vpop.f32.mrf.mxu0
    %1149 = vdwg.mxu0
    %v1150 = vadd.f32 %v1102, %v1145
    %v1151 = vxor.u32 %v1150, 2147483648
    %v1152 = vmul.f32 %v1151, 1.442695
    %v1153 = vpow.pop %v1152
    %v1154 = vadd.f32 %v1153, 1.0
    %v1155 = vrcp.pop %v1154
    %v1156 = vmul.f32 1.0, %v1155
    %v1157 = vtanh.pop %v1150
    %v1158 = vmul.f32 %v1156, %v1094
    %1160 = vrot.lane.b32.xlu0 %v1157, 32
    %v1161 = vpop.permute.xlu0 %1160
    %v1163 = vmul.f32 %v1156, %v1161
    %1165 = vrot.lane.b32.xlu0 %v1163, 32
    %v1166 = vpop.permute.xlu0 %1165
    %v1168 = vadd.f32 %v1158, %v1166
    %v1169 = vtanh.pop %v1168
    %1171 = vrot.lane.b32.xlu0 %v1169, 32
    %v1172 = vpop.permute.xlu0 %1171
    %v1174 = vmul.f32 %v1156, %v1172
    %v1175 = vld [vmem:[#allocation2 + $0x38] sm:$0xff]
    %v1176 = vadd.f32 %v1175, %v647
    %v1177 = vpack.c.bf16 %v1174, %v1174
    %1179 = vrot.lane.b32.xlu0 %v1177, 64
    %v1180 = vpop.permute.xlu0 %1179
    %v1182 = vsel %vm662, %v1180, 0
    %1184 = vmatprep.subr.bf16.mxu0 0
    %1185 = vmatpush1.bf16.msra.mxu0 0
    %1186 = vmatprep.subr.bf16.mxu0 0
    %1187 = vmatpush1.bf16.msra.mxu0 0
    %1188 = vmatprep.subr.bf16.mxu0 0
    %1189 = vmatpush1.bf16.msra.mxu0 0
    %1190 = vmatprep.subr.bf16.mxu0 0
    %1191 = vmatpush1.bf16.msra.mxu0 0
    %1192 = vmatprep.subr.bf16.mxu0 0
    %1193 = vmatpush1.bf16.msra.mxu0 0
    %1194 = vmatprep.subr.bf16.mxu0 0
    %1195 = vmatpush1.bf16.msra.mxu0 0
    %1196 = vmatprep.subr.bf16.mxu0 0
    %1197 = vmatpush1.bf16.msra.mxu0 %v659
    %1198 = vmatprep.subr.bf16.mxu0 0
    %1199 = vmatpush1.bf16.msra.mxu0 %v658
    %1200 = vmatprep.subr.bf16.mxu0 0
    %1201 = vmatpush2.bf16.msra.mxu0 0
    %1202 = vmatprep.subr.bf16.mxu0 0
    %1203 = vmatpush2.bf16.msra.mxu0 0
    %1204 = vmatprep.subr.bf16.mxu0 0
    %1205 = vmatpush2.bf16.msra.mxu0 0
    %1206 = vmatprep.subr.bf16.mxu0 0
    %1207 = vmatpush2.bf16.msra.mxu0 0
    %1208 = vmatprep.subr.bf16.mxu0 0
    %1209 = vmatpush2.bf16.msra.mxu0 0
    %1210 = vmatprep.subr.bf16.mxu0 0
    %1211 = vmatpush2.bf16.msra.mxu0 0
    %1212 = vmatprep.subr.bf16.mxu0 0
    %1213 = vmatpush2.bf16.msra.mxu0 0
    %1214 = vmatprep.subr.bf16.mxu0 0
    %1215 = vmatpush2.bf16.msra.mxu0 0
    %1216 = vmatprep.mubr.bf16.mxu0 0
    %1217 = vmatmul.mubr.bf16.gmra.mxu0 %v1182
    %v1218 = vpop.f32.mrf.mxu0
    %v1219 = vadd.f32 0.0, %v1218
    %v1220 = vpop.f32.mrf.mxu0
    %v1221 = vpop.f32.mrf.mxu0
    %v1222 = vpop.f32.mrf.mxu0
    %1223 = vdwg.mxu0
    %v1224 = vadd.f32 %v1176, %v1219
    %v1225 = vxor.u32 %v1224, 2147483648
    %v1226 = vmul.f32 %v1225, 1.442695
    %v1227 = vpow.pop %v1226
    %v1228 = vadd.f32 %v1227, 1.0
    %v1229 = vrcp.pop %v1228
    %v1230 = vmul.f32 1.0, %v1229
    %v1231 = vtanh.pop %v1224
    %v1232 = vmul.f32 %v1230, %v1168
    %1234 = vrot.lane.b32.xlu0 %v1231, 32
    %v1235 = vpop.permute.xlu0 %1234
    %v1237 = vmul.f32 %v1230, %v1235
    %1239 = vrot.lane.b32.xlu0 %v1237, 32
    %v1240 = vpop.permute.xlu0 %1239
    %v1242 = vadd.f32 %v1232, %v1240
    %v1243 = vtanh.pop %v1242
    %1245 = vrot.lane.b32.xlu0 %v1243, 32
    %v1246 = vpop.permute.xlu0 %1245
    %v1248 = vmul.f32 %v1230, %v1246
    %v1249 = vld [vmem:[#allocation6] sm:$0xf]
    %v1250 = vld [vmem:[%s5] sm:$0x7]
    %v1251 = vpack.c.bf16 %v1248, %v1248
    %v1252 = vld [vmem:[%s6] sm:$0xf]
    %v1253 = vld [vmem:[%s6 + $0x4] sm:$0xf]
    %v1254 = vld [vmem:[%s6 + $0x8] sm:$0xf]
    %v1255 = vld [vmem:[%s6 + $0xc] sm:$0xf]
    %1257 = vrot.lane.b32.xlu0 %v1251, 64
    %v1258 = vpop.permute.xlu0 %1257
    %v1263 = vunpack.c.l.b16 %v1252
    %v1264 = vunpack.c.l.b16 %v1253
    %v1265 = vunpack.c.l.b16 %v1254
    %v1266 = vunpack.c.l.b16 %v1255
    %v1267 = vpack.c.b16 %v1264, %v1263
    %v1268 = vpack.c.b16 %v1266, %v1265
    %v1272 = vsel %vm662, %v1258, 0
    %1274 = vmatprep.subr.bf16.mxu0 0
    %1275 = vmatpush1.bf16.msra.mxu0 0
    %1276 = vmatprep.subr.bf16.mxu0 0
    %1277 = vmatpush1.bf16.msra.mxu0 0
    %1278 = vmatprep.subr.bf16.mxu0 0
    %1279 = vmatpush1.bf16.msra.mxu0 0
    %1280 = vmatprep.subr.bf16.mxu0 0
    %1281 = vmatpush1.bf16.msra.mxu0 0
    %1282 = vmatprep.subr.bf16.mxu0 0
    %1283 = vmatpush1.bf16.msra.mxu0 0
    %1284 = vmatprep.subr.bf16.mxu0 0
    %1285 = vmatpush1.bf16.msra.mxu0 0
    %1286 = vmatprep.subr.bf16.mxu0 0
    %1287 = vmatpush1.bf16.msra.mxu0 %v1268
    %1288 = vmatprep.subr.bf16.mxu0 0
    %1289 = vmatpush1.bf16.msra.mxu0 %v1267
    %1290 = vmatprep.subr.bf16.mxu0 0
    %1291 = vmatpush2.bf16.msra.mxu0 0
    %1292 = vmatprep.subr.bf16.mxu0 0
    %1293 = vmatpush2.bf16.msra.mxu0 0
    %1294 = vmatprep.subr.bf16.mxu0 0
    %1295 = vmatpush2.bf16.msra.mxu0 0
    %1296 = vmatprep.subr.bf16.mxu0 0
    %1297 = vmatpush2.bf16.msra.mxu0 0
    %1298 = vmatprep.subr.bf16.mxu0 0
    %1299 = vmatpush2.bf16.msra.mxu0 0
    %1300 = vmatprep.subr.bf16.mxu0 0
    %1301 = vmatpush2.bf16.msra.mxu0 0
    %1302 = vmatprep.subr.bf16.mxu0 0
    %1303 = vmatpush2.bf16.msra.mxu0 0
    %1304 = vmatprep.subr.bf16.mxu0 0
    %1305 = vmatpush2.bf16.msra.mxu0 0
    %1306 = vmatprep.mubr.bf16.mxu0 0
    %1307 = vmatmul.mubr.bf16.gmra.mxu0 %v1272
    %v1308 = vpop.f32.mrf.mxu0
    %v1309 = vadd.f32 0.0, %v1308
    %v1310 = vpop.f32.mrf.mxu0
    %v1311 = vpop.f32.mrf.mxu0
    %v1312 = vpop.f32.mrf.mxu0
    %1313 = vdwg.mxu0
    %vm1314 = vcmask 48128
    %v1316 = vsel %vm1314, %v1249, 0
    %vm1318 = vcmask 1042432
    %v1320 = vsel %vm1318, %v1250, 0
    %1322 = vmatprep.subr.bf16.mxu0 0
    %1323 = vmatpush1.bf16.msra.mxu0 0
    %1324 = vmatprep.subr.bf16.mxu0 0
    %1325 = vmatpush1.bf16.msra.mxu0 0
    %1326 = vmatprep.subr.bf16.mxu0 0
    %1327 = vmatpush1.bf16.msra.mxu0 0
    %1328 = vmatprep.subr.bf16.mxu0 0
    %1329 = vmatpush1.bf16.msra.mxu0 0
    %1330 = vmatprep.subr.bf16.mxu0 0
    %1331 = vmatpush1.bf16.msra.mxu0 0
    %1332 = vmatprep.subr.bf16.mxu0 0
    %1333 = vmatpush1.bf16.msra.mxu0 0
    %1334 = vmatprep.subr.bf16.mxu0 0
    %1335 = vmatpush1.bf16.msra.mxu0 0
    %1336 = vmatprep.subr.bf16.mxu0 0
    %1337 = vmatpush1.bf16.msra.mxu0 %v1320
    %1338 = vmatprep.subr.bf16.mxu0 0
    %1339 = vmatpush2.bf16.msra.mxu0 0
    %1340 = vmatprep.subr.bf16.mxu0 0
    %1341 = vmatpush2.bf16.msra.mxu0 0
    %1342 = vmatprep.subr.bf16.mxu0 0
    %1343 = vmatpush2.bf16.msra.mxu0 0
    %1344 = vmatprep.subr.bf16.mxu0 0
    %1345 = vmatpush2.bf16.msra.mxu0 0
    %1346 = vmatprep.subr.bf16.mxu0 0
    %1347 = vmatpush2.bf16.msra.mxu0 0
    %1348 = vmatprep.subr.bf16.mxu0 0
    %1349 = vmatpush2.bf16.msra.mxu0 0
    %1350 = vmatprep.subr.bf16.mxu0 0
    %1351 = vmatpush2.bf16.msra.mxu0 0
    %1352 = vmatprep.subr.bf16.mxu0 0
    %1353 = vmatpush2.bf16.msra.mxu0 0
    %1354 = vmatprep.mubr.bf16.mxu0 0
    %1355 = vmatmul.mubr.bf16.gmra.mxu0 %v1316
    %v1356 = vpop.f32.mrf.mxu0
    %v1357 = vadd.f32 %v1309, %v1356
    %v1358 = vpop.f32.mrf.mxu0
    %v1359 = vpop.f32.mrf.mxu0
    %v1360 = vpop.f32.mrf.mxu0
    %1361 = vdwg.mxu0
    %v1362 = vld [vmem:[%s7] sm:$0x1]
    %v1364 = vlaneseq
    %v1365 = vshrl.u32 %v1364, 7
    %v1366 = vsub.s32 0, %v1365
    %v1367 = vrot.slane %v1362, %v1366
    %v1369 = vadd.f32 %v1357, %v1367
    %v1370 = vmax.f32 %v1369, 0.0
    %v1371 = vpack.c.bf16 %v1370, %v1370
    %v1372 = vld [vmem:[%s8] sm:$0xf]
    %v1373 = vld [vmem:[%s8 + $0x4] sm:$0xf]
    %v1374 = vld [vmem:[%s8 + $0x8] sm:$0xf]
    %v1375 = vld [vmem:[%s8 + $0xc] sm:$0xf]
    %v1376 = vld [vmem:[%s8 + $0x10] sm:$0xf]
    %v1377 = vld [vmem:[%s8 + $0x14] sm:$0xf]
    %v1378 = vld [vmem:[%s8 + $0x18] sm:$0xf]
    %v1379 = vld [vmem:[%s8 + $0x1c] sm:$0xf]
    %v1380 = vld [vmem:[%s9] sm:$0x1]
    %v1382 = vlaneseq
    %v1383 = vshrl.u32 %v1382, 7
    %v1384 = vsub.s32 0, %v1383
    %v1385 = vrot.slane %v1380, %v1384
    %v1395 = vunpack.c.l.b16 %v1372
    %v1396 = vunpack.c.l.b16 %v1373
    %v1397 = vunpack.c.l.b16 %v1374
    %v1398 = vunpack.c.l.b16 %v1375
    %v1399 = vunpack.c.l.b16 %v1376
    %v1400 = vunpack.c.l.b16 %v1377
    %v1401 = vunpack.c.l.b16 %v1378
    %v1402 = vunpack.c.l.b16 %v1379
    %v1403 = vpack.c.b16 %v1396, %v1395
    %v1404 = vpack.c.b16 %v1398, %v1397
    %v1405 = vpack.c.b16 %v1400, %v1399
    %v1406 = vpack.c.b16 %v1402, %v1401
    %vm1411 = vcmask 523264
    %v1413 = vsel %vm1411, %v1371, 0
    %1415 = vmatprep.subr.bf16.mxu0 0
    %1416 = vmatpush1.bf16.msra.mxu0 0
    %1417 = vmatprep.subr.bf16.mxu0 0
    %1418 = vmatpush1.bf16.msra.mxu0 0
    %1419 = vmatprep.subr.bf16.mxu0 0
    %1420 = vmatpush1.bf16.msra.mxu0 0
    %1421 = vmatprep.subr.bf16.mxu0 0
    %1422 = vmatpush1.bf16.msra.mxu0 0
    %1423 = vmatprep.subr.bf16.mxu0 0
    %1424 = vmatpush1.bf16.msra.mxu0 %v1406
    %1425 = vmatprep.subr.bf16.mxu0 0
    %1426 = vmatpush1.bf16.msra.mxu0 %v1405
    %1427 = vmatprep.subr.bf16.mxu0 0
    %1428 = vmatpush1.bf16.msra.mxu0 %v1404
    %1429 = vmatprep.subr.bf16.mxu0 0
    %1430 = vmatpush1.bf16.msra.mxu0 %v1403
    %1431 = vmatprep.subr.bf16.mxu0 0
    %1432 = vmatpush2.bf16.msra.mxu0 0
    %1433 = vmatprep.subr.bf16.mxu0 0
    %1434 = vmatpush2.bf16.msra.mxu0 0
    %1435 = vmatprep.subr.bf16.mxu0 0
    %1436 = vmatpush2.bf16.msra.mxu0 0
    %1437 = vmatprep.subr.bf16.mxu0 0
    %1438 = vmatpush2.bf16.msra.mxu0 0
    %1439 = vmatprep.subr.bf16.mxu0 0
    %1440 = vmatpush2.bf16.msra.mxu0 0
    %1441 = vmatprep.subr.bf16.mxu0 0
    %1442 = vmatpush2.bf16.msra.mxu0 0
    %1443 = vmatprep.subr.bf16.mxu0 0
    %1444 = vmatpush2.bf16.msra.mxu0 0
    %1445 = vmatprep.subr.bf16.mxu0 0
    %1446 = vmatpush2.bf16.msra.mxu0 0
    %1447 = vmatprep.mubr.bf16.mxu0 0
    %1448 = vmatmul.mubr.bf16.gmra.mxu0 %v1413
    %v1449 = vpop.f32.mrf.mxu0
    %v1450 = vadd.f32 %v1385, %v1449
    %v1451 = vpop.f32.mrf.mxu0
    %v1452 = vpop.f32.mrf.mxu0
    %v1453 = vpop.f32.mrf.mxu0
    %1454 = vdwg.mxu0
    %v1455 = vmax.f32 %v1450, 0.0
    %v1456 = vpack.c.bf16 %v1455, %v1455
    %v1457 = vld [vmem:[%s10] sm:$0xf]
    %v1458 = vld [vmem:[%s10 + $0x4] sm:$0xf]
    %v1459 = vld [vmem:[%s10 + $0x8] sm:$0xf]
    %v1460 = vld [vmem:[%s10 + $0xc] sm:$0xf]
    %v1461 = vld [vmem:[%s11] sm:$0x1]
    %v1463 = vlaneseq
    %v1464 = vshrl.u32 %v1463, 7
    %v1465 = vsub.s32 0, %v1464
    %v1466 = vrot.slane %v1461, %v1465
    %v1472 = vunpack.c.l.b16 %v1457
    %v1473 = vunpack.c.l.b16 %v1458
    %v1474 = vunpack.c.l.b16 %v1459
    %v1475 = vunpack.c.l.b16 %v1460
    %v1476 = vpack.c.b16 %v1473, %v1472
    %v1477 = vpack.c.b16 %v1475, %v1474
    %v1481 = vsel %vm662, %v1456, 0
    %1483 = vmatprep.subr.bf16.mxu0 0
    %1484 = vmatpush1.bf16.msra.mxu0 0
    %1485 = vmatprep.subr.bf16.mxu0 0
    %1486 = vmatpush1.bf16.msra.mxu0 0
    %1487 = vmatprep.subr.bf16.mxu0 0
    %1488 = vmatpush1.bf16.msra.mxu0 0
    %1489 = vmatprep.subr.bf16.mxu0 0
    %1490 = vmatpush1.bf16.msra.mxu0 0
    %1491 = vmatprep.subr.bf16.mxu0 0
    %1492 = vmatpush1.bf16.msra.mxu0 0
    %1493 = vmatprep.subr.bf16.mxu0 0
    %1494 = vmatpush1.bf16.msra.mxu0 0
    %1495 = vmatprep.subr.bf16.mxu0 0
    %1496 = vmatpush1.bf16.msra.mxu0 %v1477
    %1497 = vmatprep.subr.bf16.mxu0 0
    %1498 = vmatpush1.bf16.msra.mxu0 %v1476
    %1499 = vmatprep.subr.bf16.mxu0 0
    %1500 = vmatpush2.bf16.msra.mxu0 0
    %1501 = vmatprep.subr.bf16.mxu0 0
    %1502 = vmatpush2.bf16.msra.mxu0 0
    %1503 = vmatprep.subr.bf16.mxu0 0
    %1504 = vmatpush2.bf16.msra.mxu0 0
    %1505 = vmatprep.subr.bf16.mxu0 0
    %1506 = vmatpush2.bf16.msra.mxu0 0
    %1507 = vmatprep.subr.bf16.mxu0 0
    %1508 = vmatpush2.bf16.msra.mxu0 0
    %1509 = vmatprep.subr.bf16.mxu0 0
    %1510 = vmatpush2.bf16.msra.mxu0 0
    %1511 = vmatprep.subr.bf16.mxu0 0
    %1512 = vmatpush2.bf16.msra.mxu0 0
    %1513 = vmatprep.subr.bf16.mxu0 0
    %1514 = vmatpush2.bf16.msra.mxu0 0
    %1515 = vmatprep.mubr.bf16.mxu0 0
    %1516 = vmatmul.mubr.bf16.gmra.mxu0 %v1481
    %v1517 = vpop.f32.mrf.mxu0
    %v1518 = vadd.f32 %v1466, %v1517
    %v1519 = vpop.f32.mrf.mxu0
    %v1520 = vpop.f32.mrf.mxu0
    %v1521 = vpop.f32.mrf.mxu0
    %1522 = vdwg.mxu0
    %1523 = vst [vmem:[#allocation9] sm:$0xff] %v1518
    // Predicated region
    $region62: #{tpu_custom_call.1} parent=1 // pred_check
      _
    $region63: #{tpu_custom_call.1} parent=1 // pred_check_branch
      %1525 = sbr.rel (0) target = $region65
    $region64: #{tpu_custom_call.1} parent=1 // pred_region
      %s1527 = ssub.s32 128, 128
      %1528 = vsyncadd [#allocation5], %s1527
      %s1530 = sshll.u32 [#allocation9], 4
      %s1531 = int_to_ptr.vmem [resolvable:$true] %s1530
      %1533 = dma.vmem_to_hbm [thread:$0]  %s1531, 128, %s12, [#allocation5]
    $region65: #{tpu_custom_call.1} parent=1 // pred_fallthru
      _
    // Predicated region
    $region66: #{tpu_custom_call.1} parent=1 // pred_check
      _
    $region67: #{tpu_custom_call.1} parent=1 // pred_check_branch
      %1535 = sbr.rel (0) target = $region69
    $region68: #{tpu_custom_call.1} parent=1 // pred_region
      %1536 = dma.done [#allocation5], 128
    $region69: #{tpu_custom_call.1} parent=1 // pred_fallthru
      _
    %1537 = vsyncpa [#allocation4], 1
    %1538 = vsyncpa [#allocation7], 1
    %1539 = vsyncpa [#allocation5], 1

</llo_original>
